<compile_context>
chip_gen: v7x
topology: tpu7x:2x2x1
jax: 0.10.0
libtpu: 0.0.40
codegen_flags: <defaults>
</compile_context>

<pallas_src>
import jax
import jax.numpy as jnp
from jax.experimental import pallas as pl
from jax.experimental.pallas import tpu as pltpu


# ----------------------------------------------------------------------------
# Fused GWNN forward kernel: one grid step per graph, everything VMEM-resident.
# ----------------------------------------------------------------------------
def _gwnn_fused_kernel(phi_ref, phi_inv_ref, x_ref, d1_ref, w1_ref, d2_ref,
                       w2_ref, o_ref):
    f32 = jnp.float32
    bf16 = jnp.bfloat16

    # ---- Layer 1: relu( Phi @ (d1 * ((Phi_inv @ X) @ W1)) ) -----------------
    # Reassociated (F < C): N*N*F + N*F*C MACs instead of N*F*C + N*N*C.
    px = jnp.dot(phi_inv_ref[...], x_ref[...], preferred_element_type=f32)    # (N, F)
    t1 = jnp.dot(px.astype(bf16), w1_ref[...], preferred_element_type=f32)    # (N, C)
    t1 = d1_ref[...] * t1                                                     # diag(d1) @ .
    h1 = jnp.maximum(
        jnp.dot(phi_ref[...], t1.astype(bf16), preferred_element_type=f32),
        0.0)                                                                  # (N, C)
    # TODO(synk): training-mode dropout omitted (eval-mode F.dropout == identity).

    # ---- Layer 2: Phi @ (d2 * (Phi_inv @ (H1 @ W2))) ------------------------
    hw = jnp.dot(h1.astype(bf16), w2_ref[...], preferred_element_type=f32)    # (N, C)
    t2 = jnp.dot(phi_inv_ref[...], hw.astype(bf16), preferred_element_type=f32)
    t2 = d2_ref[...] * t2                                                     # diag(d2) @ .
    o_ref[...] = jnp.dot(phi_ref[...], t2.astype(bf16),
                         preferred_element_type=f32).astype(o_ref.dtype)


def gwnn_forward(phi, phi_inv, features, d1, w1, d2, w2):
    """Fused 2-layer GWNN forward, batched over graphs.

    phi, phi_inv : (B, N, N) dense wavelet / inverse-wavelet matrices
    features     : (B, N, F) dense node features
    d1, d2       : (N, 1)    diagonal wavelet-filter parameters (kept f32)
    w1 : (F, C), w2 : (C, C) layer weights
    returns      : (B, N, C) float32
    """
    b, n, _ = phi.shape
    f = features.shape[-1]
    c = w2.shape[-1]

    bf16 = jnp.bfloat16
    phi = phi.astype(bf16)
    phi_inv = phi_inv.astype(bf16)
    features = features.astype(bf16)
    w1 = w1.astype(bf16)
    w2 = w2.astype(bf16)
    d1 = d1.astype(jnp.float32)
    d2 = d2.astype(jnp.float32)

    # Per-graph blocks (leading batch dim squeezed) vs. shared, grid-invariant
    # parameter blocks (same block index every step -> loaded once, resident).
    per_graph = lambda shape: pl.BlockSpec(
        (None,) + shape, lambda i, _s=shape: (i,) + (0,) * len(_s))
    shared = lambda shape: pl.BlockSpec(
        shape, lambda i, _s=shape: (0,) * len(_s))

    # Advisory cost estimate (MACs x2) and explicit scoped-VMEM budget.
    flops = 2 * b * (n * n * f + n * f * c      # layer 1 (reassociated) pre-phi
                     + n * n * c                # layer 1: phi @ .
                     + n * c * c                # layer 2: H1 @ W2
                     + 2 * n * n * c)           # layer 2: phi_inv @ . ; phi @ .
    bytes_in = b * (2 * n * n + n * f) * 2 + (f * c + c * c) * 2 + 2 * n * 4
    bytes_out = b * n * c * 4
    vmem_step = (2 * (2 * n * n * 2 + n * f * 2 + n * c * 4)   # dbl-buffered blocks
                 + (f * c + c * c) * 2 + 2 * n * 4             # shared weights
                 + 8 * n * c * 4)                              # f32 temps slack
    vmem_limit = int(min(max(2 * vmem_step, 4 * 1024 * 1024), 48 * 1024 * 1024))

    return pl.pallas_call(
        _gwnn_fused_kernel,
        out_shape=jax.ShapeDtypeStruct((b, n, c), jnp.float32),
        grid=(b,),
        in_specs=[per_graph((n, n)),   # phi
                  per_graph((n, n)),   # phi_inv
                  per_graph((n, f)),   # features
                  shared((n, 1)),      # d1
                  shared((f, c)),      # w1
                  shared((n, 1)),      # d2
                  shared((c, c))],     # w2
        out_specs=per_graph((n, c)),
        compiler_params=pltpu.CompilerParams(
            dimension_semantics=("parallel",),
            vmem_limit_bytes=vmem_limit),
        cost_estimate=pl.CostEstimate(flops=flops, transcendentals=0,
                                      bytes_accessed=bytes_in + bytes_out),
    )(phi, phi_inv, features, d1, w1, d2, w2)


# ----------------------------------------------------------------------------
# Sparse (COO) -> dense helper, mirroring the torch module's sparse inputs.
# NOTE: densification is a one-time preprocessing step, not the per-forward
# hot path (the N^2 scatter would dwarf the kernel if done every call).
# ----------------------------------------------------------------------------
def coo_to_dense(indices, values, shape):
    """indices: (2, nnz) int32; values: (nnz,). Duplicates sum (coalesce)."""
    return jnp.zeros(shape, jnp.float32).at[indices[0], indices[1]].add(values)


def gwnn_apply(phi_indices, phi_values, phi_inverse_indices, phi_inverse_values,
               feature_indices, feature_values, params, *, ncount, feature_number):
    """Same argument structure as GWNN.forward (single graph, convenience path)."""
    d1, w1, d2, w2 = params
    phi = coo_to_dense(phi_indices, phi_values, (ncount, ncount))
    phi_inv = coo_to_dense(phi_inverse_indices, phi_inverse_values, (ncount, ncount))
    x = coo_to_dense(feature_indices, feature_values, (ncount, feature_number))
    return gwnn_forward(phi[None], phi_inv[None], x[None], d1, w1, d2, w2)[0]


# ----------------------------------------------------------------------------
# Pure-JAX f32 reference (same math as the torch spspmm/spmm chain).
# ----------------------------------------------------------------------------
def _reference(phi, phi_inv, x, d1, w1, d2, w2):
    h1 = jnp.maximum(phi @ (d1 * (phi_inv @ (x @ w1))), 0.0)
    return phi @ (d2 * (phi_inv @ (h1 @ w2)))


if __name__ == "__main__":
    B = 2     # graphs per pallas_call (leading "parallel" grid axis)
    N = 128   # ncount
    F = 64    # feats_per_node
    C = 128   # filters (lane-dense: multiple of 128)

    kg = jax.random.split(jax.random.PRNGKey(0), B)
    kp = jax.random.split(jax.random.PRNGKey(1), 4)

    def sparse_dense(k, shape, density, scale):
        km, kv = jax.random.split(k)
        mask = jax.random.uniform(km, shape) < density
        vals = jax.random.uniform(kv, shape, minval=-scale, maxval=scale)
        return jnp.where(mask, vals, 0.0)

    def to_coo(m):
        rows, cols = jnp.nonzero(m)
        return jnp.stack([rows, cols]).astype(jnp.int32), m[rows, cols]

    # Build B graphs' sparse wavelet matrices + features, round-tripped through
    # COO (indices, values) like the torch module, densified ONCE (cached).
    phis, phi_invs, feats = [], [], []
    for g in range(B):
        k0, k1, k2 = jax.random.split(kg[g], 3)
        phi_d = sparse_dense(k0, (N, N), 0.08, 0.5) + jnp.eye(N, dtype=jnp.float32)
        phi_inv_d = sparse_dense(k1, (N, N), 0.08, 0.5) + jnp.eye(N, dtype=jnp.float32)
        feat_d = sparse_dense(k2, (N, F), 0.3, 1.0)
        for dense, lst in ((phi_d, phis), (phi_inv_d, phi_invs), (feat_d, feats)):
            idx, val = to_coo(dense)
            lst.append(coo_to_dense(idx, val, dense.shape))
    phi = jnp.stack(phis)           # (B, N, N)
    phi_inv = jnp.stack(phi_invs)   # (B, N, N)
    x = jnp.stack(feats)            # (B, N, F)

    # Parameters (shared across graphs): xavier weights, diag filters ~ U(0.9,1.1)
    # (matches GraphWaveletLayer.init_parameters).
    def xavier(k, shape):
        s = jnp.sqrt(6.0 / (shape[0] + shape[1]))
        return jax.random.uniform(k, shape, jnp.float32, minval=-s, maxval=s)

    d1 = jax.random.uniform(kp[0], (N, 1), jnp.float32, minval=0.9, maxval=1.1)
    w1 = xavier(kp[1], (F, C))
    d2 = jax.random.uniform(kp[2], (N, 1), jnp.float32, minval=0.9, maxval=1.1)
    w2 = xavier(kp[3], (C, C))

    out = jax.block_until_ready(gwnn_forward(phi, phi_inv, x, d1, w1, d2, w2))

    ref = jax.vmap(lambda p, pi, xx: _reference(p, pi, xx, d1, w1, d2, w2))(
        phi, phi_inv, x)

    assert out.shape == (B, N, C), out.shape
    max_err = float(jnp.max(jnp.abs(out - ref)))
    # bf16 MXU operands (f32 accumulation) vs. f32 reference -> relaxed tolerance.
    assert jnp.allclose(out, ref, atol=5e-2, rtol=5e-2), max_err

    print("KERNEL_OK")
</pallas_src>

<mosaic_0001>
module attributes {stable_mosaic.version = 11 : i64} {
  func.func @_gwnn_fused_kernel(%arg0: i32, %arg1: memref<1x128x128xbf16, #tpu.memory_space<vmem>>, %arg2: memref<1x128x128xbf16, #tpu.memory_space<vmem>>, %arg3: memref<1x128x64xbf16, #tpu.memory_space<vmem>>, %arg4: memref<128x1xf32, #tpu.memory_space<vmem>>, %arg5: memref<64x128xbf16, #tpu.memory_space<vmem>>, %arg6: memref<128x1xf32, #tpu.memory_space<vmem>>, %arg7: memref<128x128xbf16, #tpu.memory_space<vmem>>, %arg8: memref<1x128x128xf32, #tpu.memory_space<vmem>>) attributes {dimension_semantics = [#tpu.dimension_semantics<parallel>], iteration_bounds = array<i64: 2>, scalar_prefetch = 0 : i64, scratch_operands = 0 : i64, tpu.core_type = #tpu.core_type<tc>, window_params = [{transform_indices = @transform_0, window_bounds = array<i64: 1, 128, 128>}, {transform_indices = @transform_1, window_bounds = array<i64: 1, 128, 128>}, {transform_indices = @transform_2, window_bounds = array<i64: 1, 128, 64>}, {pipeline_mode = #tpu.pipeline_mode<synchronous>, transform_indices = @transform_3, window_bounds = array<i64: 128, 1>}, {pipeline_mode = #tpu.pipeline_mode<synchronous>, transform_indices = @transform_4, window_bounds = array<i64: 64, 128>}, {pipeline_mode = #tpu.pipeline_mode<synchronous>, transform_indices = @transform_5, window_bounds = array<i64: 128, 1>}, {pipeline_mode = #tpu.pipeline_mode<synchronous>, transform_indices = @transform_6, window_bounds = array<i64: 128, 128>}, {transform_indices = @transform_7, window_bounds = array<i64: 1, 128, 128>}]} {
    %c0 = arith.constant 0 : index
    %c0_0 = arith.constant 0 : index
    %c0_1 = arith.constant 0 : index
    %0 = vector.load %arg2[%c0, %c0_0, %c0_1] : memref<1x128x128xbf16, #tpu.memory_space<vmem>>, vector<1x128x128xbf16>
    %1 = vector.shape_cast %0 : vector<1x128x128xbf16> to vector<128x128xbf16>
    %c0_2 = arith.constant 0 : index
    %c0_3 = arith.constant 0 : index
    %c0_4 = arith.constant 0 : index
    %2 = vector.load %arg3[%c0_2, %c0_3, %c0_4] : memref<1x128x64xbf16, #tpu.memory_space<vmem>>, vector<1x128x64xbf16>
    %3 = vector.shape_cast %2 : vector<1x128x64xbf16> to vector<128x64xbf16>
    %cst = arith.constant dense<0.000000e+00> : vector<128x64xf32>
    %4 = tpu.matmul %1, %3, %cst {dimension_numbers = #tpu.dot_dimension_numbers<[1], [0], [0], [1], [0, 0, 1, 1], [], []>} : vector<128x128xbf16>, vector<128x64xbf16>, vector<128x64xf32> -> vector<128x64xf32>
    %5 = arith.truncf %4 : vector<128x64xf32> to vector<128x64xbf16>
    %c0_5 = arith.constant 0 : index
    %c0_6 = arith.constant 0 : index
    %6 = vector.load %arg5[%c0_5, %c0_6] : memref<64x128xbf16, #tpu.memory_space<vmem>>, vector<64x128xbf16>
    %cst_7 = arith.constant dense<0.000000e+00> : vector<128x128xf32>
    %7 = tpu.matmul %5, %6, %cst_7 {dimension_numbers = #tpu.dot_dimension_numbers<[1], [0], [0], [1], [0, 0, 1, 1], [], []>} : vector<128x64xbf16>, vector<64x128xbf16>, vector<128x128xf32> -> vector<128x128xf32>
    %c0_8 = arith.constant 0 : index
    %c0_9 = arith.constant 0 : index
    %8 = vector.load %arg4[%c0_8, %c0_9] : memref<128x1xf32, #tpu.memory_space<vmem>>, vector<128x1xf32>
    %9 = vector.broadcast %8 : vector<128x1xf32> to vector<128x128xf32>
    %10 = arith.mulf %9, %7 : vector<128x128xf32>
    %c0_10 = arith.constant 0 : index
    %c0_11 = arith.constant 0 : index
    %c0_12 = arith.constant 0 : index
    %11 = vector.load %arg1[%c0_10, %c0_11, %c0_12] : memref<1x128x128xbf16, #tpu.memory_space<vmem>>, vector<1x128x128xbf16>
    %12 = vector.shape_cast %11 : vector<1x128x128xbf16> to vector<128x128xbf16>
    %13 = arith.truncf %10 : vector<128x128xf32> to vector<128x128xbf16>
    %cst_13 = arith.constant dense<0.000000e+00> : vector<128x128xf32>
    %14 = tpu.matmul %12, %13, %cst_13 {dimension_numbers = #tpu.dot_dimension_numbers<[1], [0], [0], [1], [0, 0, 1, 1], [], []>} : vector<128x128xbf16>, vector<128x128xbf16>, vector<128x128xf32> -> vector<128x128xf32>
    %cst_14 = arith.constant 0.000000e+00 : f32
    %15 = vector.broadcast %cst_14 : f32 to vector<128x128xf32>
    %16 = arith.maximumf %14, %15 : vector<128x128xf32>
    %17 = arith.truncf %16 : vector<128x128xf32> to vector<128x128xbf16>
    %c0_15 = arith.constant 0 : index
    %c0_16 = arith.constant 0 : index
    %18 = vector.load %arg7[%c0_15, %c0_16] : memref<128x128xbf16, #tpu.memory_space<vmem>>, vector<128x128xbf16>
    %cst_17 = arith.constant dense<0.000000e+00> : vector<128x128xf32>
    %19 = tpu.matmul %17, %18, %cst_17 {dimension_numbers = #tpu.dot_dimension_numbers<[1], [0], [0], [1], [0, 0, 1, 1], [], []>} : vector<128x128xbf16>, vector<128x128xbf16>, vector<128x128xf32> -> vector<128x128xf32>
    %c0_18 = arith.constant 0 : index
    %c0_19 = arith.constant 0 : index
    %c0_20 = arith.constant 0 : index
    %20 = vector.load %arg2[%c0_18, %c0_19, %c0_20] : memref<1x128x128xbf16, #tpu.memory_space<vmem>>, vector<1x128x128xbf16>
    %21 = vector.shape_cast %20 : vector<1x128x128xbf16> to vector<128x128xbf16>
    %22 = arith.truncf %19 : vector<128x128xf32> to vector<128x128xbf16>
    %cst_21 = arith.constant dense<0.000000e+00> : vector<128x128xf32>
    %23 = tpu.matmul %21, %22, %cst_21 {dimension_numbers = #tpu.dot_dimension_numbers<[1], [0], [0], [1], [0, 0, 1, 1], [], []>} : vector<128x128xbf16>, vector<128x128xbf16>, vector<128x128xf32> -> vector<128x128xf32>
    %c0_22 = arith.constant 0 : index
    %c0_23 = arith.constant 0 : index
    %24 = vector.load %arg6[%c0_22, %c0_23] : memref<128x1xf32, #tpu.memory_space<vmem>>, vector<128x1xf32>
    %25 = vector.broadcast %24 : vector<128x1xf32> to vector<128x128xf32>
    %26 = arith.mulf %25, %23 : vector<128x128xf32>
    %c0_24 = arith.constant 0 : index
    %c0_25 = arith.constant 0 : index
    %c0_26 = arith.constant 0 : index
    %27 = vector.load %arg1[%c0_24, %c0_25, %c0_26] : memref<1x128x128xbf16, #tpu.memory_space<vmem>>, vector<1x128x128xbf16>
    %28 = vector.shape_cast %27 : vector<1x128x128xbf16> to vector<128x128xbf16>
    %29 = arith.truncf %26 : vector<128x128xf32> to vector<128x128xbf16>
    %cst_27 = arith.constant dense<0.000000e+00> : vector<128x128xf32>
    %30 = tpu.matmul %28, %29, %cst_27 {dimension_numbers = #tpu.dot_dimension_numbers<[1], [0], [0], [1], [0, 0, 1, 1], [], []>} : vector<128x128xbf16>, vector<128x128xbf16>, vector<128x128xf32> -> vector<128x128xf32>
    %c0_28 = arith.constant 0 : index
    %c0_29 = arith.constant 0 : index
    %c0_30 = arith.constant 0 : index
    %31 = vector.load %arg8[%c0_28, %c0_29, %c0_30] : memref<1x128x128xf32, #tpu.memory_space<vmem>>, vector<1x128x128xf32>
    %32 = vector.shape_cast %31 : vector<1x128x128xf32> to vector<128x128xf32>
    %33 = vector.shape_cast %30 : vector<128x128xf32> to vector<1x128x128xf32>
    tpu.vector_store %arg8[%c0_28, %c0_29, %c0_30], %33 {strides = array<i32>} : memref<1x128x128xf32, #tpu.memory_space<vmem>>, vector<1x128x128xf32>,
    return
  }
  func.func @transform_0(%arg0: i32) -> (i32, i32, i32) {
    %c0_i32 = arith.constant 0 : i32
    %c0_i32_0 = arith.constant 0 : i32
    %c0_i32_1 = arith.constant 0 : i32
    return %arg0, %c0_i32, %c0_i32_0 : i32, i32, i32
  }
  func.func @transform_1(%arg0: i32) -> (i32, i32, i32) {
    %c0_i32 = arith.constant 0 : i32
    %c0_i32_0 = arith.constant 0 : i32
    %c0_i32_1 = arith.constant 0 : i32
    return %arg0, %c0_i32, %c0_i32_0 : i32, i32, i32
  }
  func.func @transform_2(%arg0: i32) -> (i32, i32, i32) {
    %c0_i32 = arith.constant 0 : i32
    %c0_i32_0 = arith.constant 0 : i32
    %c0_i32_1 = arith.constant 0 : i32
    return %arg0, %c0_i32, %c0_i32_0 : i32, i32, i32
  }
  func.func @transform_3(%arg0: i32) -> (i32, i32) {
    %c0_i32 = arith.constant 0 : i32
    %c0_i32_0 = arith.constant 0 : i32
    %c0_i32_1 = arith.constant 0 : i32
    return %c0_i32, %c0_i32_0 : i32, i32
  }
  func.func @transform_4(%arg0: i32) -> (i32, i32) {
    %c0_i32 = arith.constant 0 : i32
    %c0_i32_0 = arith.constant 0 : i32
    %c0_i32_1 = arith.constant 0 : i32
    return %c0_i32, %c0_i32_0 : i32, i32
  }
  func.func @transform_5(%arg0: i32) -> (i32, i32) {
    %c0_i32 = arith.constant 0 : i32
    %c0_i32_0 = arith.constant 0 : i32
    %c0_i32_1 = arith.constant 0 : i32
    return %c0_i32, %c0_i32_0 : i32, i32
  }
  func.func @transform_6(%arg0: i32) -> (i32, i32) {
    %c0_i32 = arith.constant 0 : i32
    %c0_i32_0 = arith.constant 0 : i32
    %c0_i32_1 = arith.constant 0 : i32
    return %c0_i32, %c0_i32_0 : i32, i32
  }
  func.func @transform_7(%arg0: i32) -> (i32, i32, i32) {
    %c0_i32 = arith.constant 0 : i32
    %c0_i32_0 = arith.constant 0 : i32
    %c0_i32_1 = arith.constant 0 : i32
    return %arg0, %c0_i32, %c0_i32_0 : i32, i32, i32
  }
}

</mosaic_0001>

<llo_original>
// kernel: tpu_custom_call.1
$region0: #{tpu_custom_call.1}
  #allocation0 [shape = 'u32[]', space=smem, size = 0x4, offset = 0x4, fixed_abs, tag = 'smem constant byte address 0x4 - core index']
  #allocation1 [shape = 'u32[144,128]{1,0:T(1,128)}', space=vmem, size = 0x12000, scoped, tag = 'internal scratch']
  %s0 = inlined_call_operand.vmem [shape: bf16[2,128,128], index: 0, kind: input, shape index: {}]
  %s1 = inlined_call_operand.vmem [shape: bf16[2,128,128], index: 1, kind: input, shape index: {}]
  %s2 = inlined_call_operand.vmem [shape: bf16[2,128,64], index: 2, kind: input, shape index: {}]
  %s3 = inlined_call_operand.vmem [shape: f32[128,1], index: 3, kind: input, shape index: {}]
  %s4 = inlined_call_operand.vmem [shape: bf16[64,128], index: 4, kind: input, shape index: {}]
  %s5 = inlined_call_operand.vmem [shape: f32[128,1], index: 5, kind: input, shape index: {}]
  %s6 = inlined_call_operand.vmem [shape: bf16[128,128], index: 6, kind: input, shape index: {}]
  %s7 = inlined_call_operand.hbm [shape: f32[2,128,128], index: 7, kind: output, shape index: {}]
  %s8 = sld [smem:[#allocation0]]
  $region61: #{tpu_custom_call.1} parent=0
    _
  %s10 = ssub.s32 1, %s8
  %s11 = scalar_select 0, %s10, %s8
  $region1: #{tpu_custom_call.1} parent=0
    #allocation2 [shape = 'u8[131072]{0}', space=vmem, size = 0x20000, scoped, tag = 'output window, operand 0']
    #allocation3 [shape = 's32[2]{0}', space=sflag, size = 0x8, scoped, tag = 'scoped memory for tpu_custom_call.1']
    %12 = vsyncpa [#allocation3], 0
    %s13 = scalar_lea.sflag [#allocation3], 1
    %14 = vsyncpa %s13, 0
    loop: start=0, step=1, limit=4
    $region2: #{tpu_custom_call.1} parent=1 // loop_pre_header
      _
    $region3: #{tpu_custom_call.1} parent=1 // loop_header
      %s16 = sphi 0, %s20
      %p17 = scmp.ge.s32.totalorder %s16, 4
      %s26 = sphi 0, %s28
      %s29 = sphi 0, %s26
      %s30 = sphi 0, %s29
      %s46 = sphi 0, %s30
      %s52 = sphi 0, %s54
      %s55 = sphi 0, %s52
      %s56 = sphi 0, %s55
      %s72 = sphi 0, %s56
      %s78 = sphi 0, %s80
      %s81 = sphi 0, %s78
      %s82 = sphi 0, %s81
      %s98 = sphi 0, %s82
      %s102 = sphi 0, %s102
      %s104 = sphi 0, %s102
      %s105 = sphi 0, %s104
      %s119 = sphi 0, %s105
      %s123 = sphi 0, %s123
      %s125 = sphi 0, %s123
      %s126 = sphi 0, %s125
      %s140 = sphi 0, %s126
      %s144 = sphi 0, %s144
      %s146 = sphi 0, %s144
      %s147 = sphi 0, %s146
      %s161 = sphi 0, %s147
      %s165 = sphi 0, %s165
      %s167 = sphi 0, %s165
      %s168 = sphi 0, %s167
      %s182 = sphi 0, %s168
      %s188 = sphi 0, %s190
      %s191 = sphi 0, %s188
      %s192 = sphi 0, %s191
      %s208 = sphi 0, %s192
    $region4: #{tpu_custom_call.1} parent=1 // loop_header_branch
      %19 = sbr.rel (%p17) target = $region8
    $region5: #{tpu_custom_call.1} parent=1 // loop_body
      %s21 = ssub.s32 %s16, 1
      %s22 = ssub.s32 %s16, 2
      %s23 = sadd.s32 %s16, 1
      %s24 = ssub.s32 %s16, %s23
      %p25 = scmp.eq.s32.totalorder %s24, 0
      %s27 = sadd.s32 %s26, 1
      %s28 = scalar_select %p25, %s26, %s27
      %p31 = pneg %p25
      %p32 = scmp.eq.s32.totalorder %s16, 1
      %p33 = por %p31, %p32
      %p34 = scmp.ne.s32.totalorder %s26, %s29
      %p35 = scmp.eq.s32.totalorder %s16, 0
      %p36 = por %p34, %p35
      %p37 = scmp.ne.s32.totalorder %s26, %s29
      %p38 = scmp.eq.s32.totalorder %s21, 1
      %p39 = por %p37, %p38
      %p40 = scmp.ne.s32.totalorder %s29, %s30
      %p41 = scmp.eq.s32.totalorder %s21, 0
      %p42 = por %p40, %p41
      %p43 = scmp.ne.s32.totalorder %s29, %s30
      %p44 = scmp.eq.s32.totalorder %s22, 1
      %p45 = por %p43, %p44
      %p47 = scmp.ne.s32.totalorder %s30, %s46
      %p48 = scmp.eq.s32.totalorder %s22, 0
      %p49 = por %p47, %p48
      %s50 = ssub.s32 %s16, %s23
      %p51 = scmp.eq.s32.totalorder %s50, 0
      %s53 = sadd.s32 %s52, 1
      %s54 = scalar_select %p51, %s52, %s53
      %p57 = pneg %p51
      %p58 = scmp.eq.s32.totalorder %s16, 1
      %p59 = por %p57, %p58
      %p60 = scmp.ne.s32.totalorder %s52, %s55
      %p61 = scmp.eq.s32.totalorder %s16, 0
      %p62 = por %p60, %p61
      %p63 = scmp.ne.s32.totalorder %s52, %s55
      %p64 = scmp.eq.s32.totalorder %s21, 1
      %p65 = por %p63, %p64
      %p66 = scmp.ne.s32.totalorder %s55, %s56
      %p67 = scmp.eq.s32.totalorder %s21, 0
      %p68 = por %p66, %p67
      %p69 = scmp.ne.s32.totalorder %s55, %s56
      %p70 = scmp.eq.s32.totalorder %s22, 1
      %p71 = por %p69, %p70
      %p73 = scmp.ne.s32.totalorder %s56, %s72
      %p74 = scmp.eq.s32.totalorder %s22, 0
      %p75 = por %p73, %p74
      %s76 = ssub.s32 %s16, %s23
      %p77 = scmp.eq.s32.totalorder %s76, 0
      %s79 = sadd.s32 %s78, 1
      %s80 = scalar_select %p77, %s78, %s79
      %p83 = pneg %p77
      %p84 = scmp.eq.s32.totalorder %s16, 1
      %p85 = por %p83, %p84
      %p86 = scmp.ne.s32.totalorder %s78, %s81
      %p87 = scmp.eq.s32.totalorder %s16, 0
      %p88 = por %p86, %p87
      %p89 = scmp.ne.s32.totalorder %s78, %s81
      %p90 = scmp.eq.s32.totalorder %s21, 1
      %p91 = por %p89, %p90
      %p92 = scmp.ne.s32.totalorder %s81, %s82
      %p93 = scmp.eq.s32.totalorder %s21, 0
      %p94 = por %p92, %p93
      %p95 = scmp.ne.s32.totalorder %s81, %s82
      %p96 = scmp.eq.s32.totalorder %s22, 1
      %p97 = por %p95, %p96
      %p99 = scmp.ne.s32.totalorder %s82, %s98
      %p100 = scmp.eq.s32.totalorder %s22, 0
      %p101 = por %p99, %p100
      %s103 = sadd.s32 %s102, 1
      %p106 = scmp.eq.s32.totalorder %s16, 1
      %p107 = scmp.ne.s32.totalorder %s102, %s104
      %p108 = scmp.eq.s32.totalorder %s16, 0
      %p109 = por %p107, %p108
      %p110 = scmp.ne.s32.totalorder %s102, %s104
      %p111 = scmp.eq.s32.totalorder %s21, 1
      %p112 = por %p110, %p111
      %p113 = scmp.ne.s32.totalorder %s104, %s105
      %p114 = scmp.eq.s32.totalorder %s21, 0
      %p115 = por %p113, %p114
      %p116 = scmp.ne.s32.totalorder %s104, %s105
      %p117 = scmp.eq.s32.totalorder %s22, 1
      %p118 = por %p116, %p117
      %p120 = scmp.ne.s32.totalorder %s105, %s119
      %p121 = scmp.eq.s32.totalorder %s22, 0
      %p122 = por %p120, %p121
      %s124 = sadd.s32 %s123, 1
      %p127 = scmp.eq.s32.totalorder %s16, 1
      %p128 = scmp.ne.s32.totalorder %s123, %s125
      %p129 = scmp.eq.s32.totalorder %s16, 0
      %p130 = por %p128, %p129
      %p131 = scmp.ne.s32.totalorder %s123, %s125
      %p132 = scmp.eq.s32.totalorder %s21, 1
      %p133 = por %p131, %p132
      %p134 = scmp.ne.s32.totalorder %s125, %s126
      %p135 = scmp.eq.s32.totalorder %s21, 0
      %p136 = por %p134, %p135
      %p137 = scmp.ne.s32.totalorder %s125, %s126
      %p138 = scmp.eq.s32.totalorder %s22, 1
      %p139 = por %p137, %p138
      %p141 = scmp.ne.s32.totalorder %s126, %s140
      %p142 = scmp.eq.s32.totalorder %s22, 0
      %p143 = por %p141, %p142
      %s145 = sadd.s32 %s144, 1
      %p148 = scmp.eq.s32.totalorder %s16, 1
      %p149 = scmp.ne.s32.totalorder %s144, %s146
      %p150 = scmp.eq.s32.totalorder %s16, 0
      %p151 = por %p149, %p150
      %p152 = scmp.ne.s32.totalorder %s144, %s146
      %p153 = scmp.eq.s32.totalorder %s21, 1
      %p154 = por %p152, %p153
      %p155 = scmp.ne.s32.totalorder %s146, %s147
      %p156 = scmp.eq.s32.totalorder %s21, 0
      %p157 = por %p155, %p156
      %p158 = scmp.ne.s32.totalorder %s146, %s147
      %p159 = scmp.eq.s32.totalorder %s22, 1
      %p160 = por %p158, %p159
      %p162 = scmp.ne.s32.totalorder %s147, %s161
      %p163 = scmp.eq.s32.totalorder %s22, 0
      %p164 = por %p162, %p163
      %s166 = sadd.s32 %s165, 1
      %p169 = scmp.eq.s32.totalorder %s16, 1
      %p170 = scmp.ne.s32.totalorder %s165, %s167
      %p171 = scmp.eq.s32.totalorder %s16, 0
      %p172 = por %p170, %p171
      %p173 = scmp.ne.s32.totalorder %s165, %s167
      %p174 = scmp.eq.s32.totalorder %s21, 1
      %p175 = por %p173, %p174
      %p176 = scmp.ne.s32.totalorder %s167, %s168
      %p177 = scmp.eq.s32.totalorder %s21, 0
      %p178 = por %p176, %p177
      %p179 = scmp.ne.s32.totalorder %s167, %s168
      %p180 = scmp.eq.s32.totalorder %s22, 1
      %p181 = por %p179, %p180
      %p183 = scmp.ne.s32.totalorder %s168, %s182
      %p184 = scmp.eq.s32.totalorder %s22, 0
      %p185 = por %p183, %p184
      %s186 = ssub.s32 %s16, %s23
      %p187 = scmp.eq.s32.totalorder %s186, 0
      %s189 = sadd.s32 %s188, 1
      %s190 = scalar_select %p187, %s188, %s189
      %p193 = pneg %p187
      %p194 = scmp.eq.s32.totalorder %s16, 1
      %p195 = por %p193, %p194
      %p196 = scmp.ne.s32.totalorder %s188, %s191
      %p197 = scmp.eq.s32.totalorder %s16, 0
      %p198 = por %p196, %p197
      %p199 = scmp.ne.s32.totalorder %s188, %s191
      %p200 = scmp.eq.s32.totalorder %s21, 1
      %p201 = por %p199, %p200
      %p202 = scmp.ne.s32.totalorder %s191, %s192
      %p203 = scmp.eq.s32.totalorder %s21, 0
      %p204 = por %p202, %p203
      %p205 = scmp.ne.s32.totalorder %s191, %s192
      %p206 = scmp.eq.s32.totalorder %s22, 1
      %p207 = por %p205, %p206
      %p209 = scmp.ne.s32.totalorder %s192, %s208
      %p210 = scmp.eq.s32.totalorder %s22, 0
      %p211 = por %p209, %p210
      %p212 = scmp.le.s32.totalorder 1, %s16
      %p213 = scmp.lt.s32.totalorder %s16, 3
      %p214 = pnand %p212, %p213
      %p215 = pneg %p214
      // Predicated region
      $region9: #{tpu_custom_call.1} parent=5 // pred_check
        _
      $region10: #{tpu_custom_call.1} parent=5 // pred_check_branch
        %217 = sbr.rel (%p214) target = $region12
      $region11: #{tpu_custom_call.1} parent=5 // pred_region
        %s218 = ssub.s32 %s16, 1
        // Predicated region
        $region13: #{tpu_custom_call.1} parent=11 // pred_check
          %p219 = pneg %p115
        $region14: #{tpu_custom_call.1} parent=11 // pred_check_branch
          %221 = sbr.rel (%p219) target = $region16
        $region15: #{tpu_custom_call.1} parent=11 // pred_region
          _
        $region16: #{tpu_custom_call.1} parent=11 // pred_fallthru
          _
        // Predicated region
        $region17: #{tpu_custom_call.1} parent=11 // pred_check
          %p222 = pneg %p136
        $region18: #{tpu_custom_call.1} parent=11 // pred_check_branch
          %224 = sbr.rel (%p222) target = $region20
        $region19: #{tpu_custom_call.1} parent=11 // pred_region
          _
        $region20: #{tpu_custom_call.1} parent=11 // pred_fallthru
          _
        // Predicated region
        $region21: #{tpu_custom_call.1} parent=11 // pred_check
          %p225 = pneg %p157
        $region22: #{tpu_custom_call.1} parent=11 // pred_check_branch
          %227 = sbr.rel (%p225) target = $region24
        $region23: #{tpu_custom_call.1} parent=11 // pred_region
          _
        $region24: #{tpu_custom_call.1} parent=11 // pred_fallthru
          _
        // Predicated region
        $region25: #{tpu_custom_call.1} parent=11 // pred_check
          %p228 = pneg %p178
        $region26: #{tpu_custom_call.1} parent=11 // pred_check_branch
          %230 = sbr.rel (%p228) target = $region28
        $region27: #{tpu_custom_call.1} parent=11 // pred_region
          _
        $region28: #{tpu_custom_call.1} parent=11 // pred_fallthru
          _
      $region12: #{tpu_custom_call.1} parent=5 // pred_fallthru
        _
      %p231 = scmp.lt.s32.totalorder %s16, 2
      // Predicated region
      $region29: #{tpu_custom_call.1} parent=5 // pred_check
        %p232 = pneg %p231
      $region30: #{tpu_custom_call.1} parent=5 // pred_check_branch
        %234 = sbr.rel (%p232) target = $region32
      $region31: #{tpu_custom_call.1} parent=5 // pred_region
        // Predicated region
        $region33: #{tpu_custom_call.1} parent=31 // pred_check
          %p235 = pneg %p36
        $region34: #{tpu_custom_call.1} parent=31 // pred_check_branch
          %237 = sbr.rel (%p235) target = $region36
        $region35: #{tpu_custom_call.1} parent=31 // pred_region
          %p238 = scmp.lt.s32.totalorder %s16, 1
          %s239 = scalar_select %p238, %s16, 1
          %s240 = smul.addr %s239, 16
          %s241 = smul.addr %s240, 4
          %s242 = scalar_lea.vmem %s0, %s241
        $region36: #{tpu_custom_call.1} parent=31 // pred_fallthru
          _
        // Predicated region
        $region37: #{tpu_custom_call.1} parent=31 // pred_check
          %p243 = pneg %p62
        $region38: #{tpu_custom_call.1} parent=31 // pred_check_branch
          %245 = sbr.rel (%p243) target = $region40
        $region39: #{tpu_custom_call.1} parent=31 // pred_region
          %p246 = scmp.lt.s32.totalorder %s16, 1
          %s247 = scalar_select %p246, %s16, 1
          %s248 = smul.addr %s247, 16
          %s249 = smul.addr %s248, 4
          %s250 = scalar_lea.vmem %s1, %s249
        $region40: #{tpu_custom_call.1} parent=31 // pred_fallthru
          _
        // Predicated region
        $region41: #{tpu_custom_call.1} parent=31 // pred_check
          %p251 = pneg %p88
        $region42: #{tpu_custom_call.1} parent=31 // pred_check_branch
          %253 = sbr.rel (%p251) target = $region44
        $region43: #{tpu_custom_call.1} parent=31 // pred_region
          %p254 = scmp.lt.s32.totalorder %s16, 1
          %s255 = scalar_select %p254, %s16, 1
          %s256 = smul.addr %s255, 16
          %s257 = smul.addr %s256, 4
          %s258 = scalar_lea.vmem %s2, %s257
        $region44: #{tpu_custom_call.1} parent=31 // pred_fallthru
          _
      $region32: #{tpu_custom_call.1} parent=5 // pred_fallthru
        _
      %p259 = scmp.le.s32.totalorder 1, %s16
      %p260 = scmp.lt.s32.totalorder %s16, 3
      %p261 = pnand %p259, %p260
      %p262 = pneg %p261
      // Predicated region
      $region45: #{tpu_custom_call.1} parent=5 // pred_check
        _
      $region46: #{tpu_custom_call.1} parent=5 // pred_check_branch
        %264 = sbr.rel (%p261) target = $region48
      $region47: #{tpu_custom_call.1} parent=5 // pred_region
        %s265 = ssub.s32 %s16, 1
        %p266 = scmp.lt.s32.totalorder %s21, 1
        %s267 = scalar_select %p266, %s21, 1
        %s268 = smul.addr %s267, 16
        %s269 = smul.addr %s268, 4
        %s270 = scalar_lea.vmem %s0, %s269
        %p271 = pneg %p42
        %p272 = pneg %p39
        %p273 = scmp.lt.s32.totalorder %s21, 1
        %s274 = scalar_select %p273, %s21, 1
        %s275 = smul.addr %s274, 16
        %s276 = smul.addr %s275, 4
        %s277 = scalar_lea.vmem %s1, %s276
        %p278 = pneg %p68
        %p279 = pneg %p65
        %p280 = scmp.lt.s32.totalorder %s21, 1
        %s281 = scalar_select %p280, %s21, 1
        %s282 = smul.addr %s281, 16
        %s283 = smul.addr %s282, 4
        %s284 = scalar_lea.vmem %s2, %s283
        %p285 = pneg %p94
        %p286 = pneg %p91
        %p287 = pneg %p115
        %p288 = pneg %p112
        %p289 = pneg %p136
        %p290 = pneg %p133
        %p291 = pneg %p157
        %p292 = pneg %p154
        %p293 = pneg %p178
        %p294 = pneg %p175
        %p295 = pneg %p204
        %p296 = pneg %p201
        %s297 = sand.u32 %s191, 1
        %s298 = scalar_lea.sflag [#allocation3], %s297
        %s299 = sand.u32 %s191, 1
        %s300 = smul.addr %s299, 128
        %s301 = scalar_lea.vmem [#allocation2], %s300
        %p302 = scmp.lt.s32.totalorder %s21, 1
        %s303 = scalar_select %p302, %s21, 1
        %s304 = smul.addr %s303, 16
        %s305 = smul.addr %s304, 4
        %s306 = scalar_lea.vmem %s0, %s305
        %p307 = scmp.lt.s32.totalorder %s21, 1
        %s308 = scalar_select %p307, %s21, 1
        %s309 = smul.addr %s308, 16
        %s310 = smul.addr %s309, 4
        %s311 = scalar_lea.vmem %s1, %s310
        %p312 = scmp.lt.s32.totalorder %s21, 1
        %s313 = scalar_select %p312, %s21, 1
        %s314 = smul.addr %s313, 16
        %s315 = smul.addr %s314, 4
        %s316 = scalar_lea.vmem %s2, %s315
        %v318 = vld [vmem:[%s311] sm:$0xf]
        %v319 = vld [vmem:[%s311 + $0x4] sm:$0xf]
        %v320 = vld [vmem:[%s311 + $0x8] sm:$0xf]
        %v321 = vld [vmem:[%s311 + $0xc] sm:$0xf]
        %v322 = vld [vmem:[%s311 + $0x10] sm:$0xf]
        %v323 = vld [vmem:[%s311 + $0x14] sm:$0xf]
        %v324 = vld [vmem:[%s311 + $0x18] sm:$0xf]
        %v325 = vld [vmem:[%s311 + $0x1c] sm:$0xf]
        %v326 = vld [vmem:[%s311 + $0x20] sm:$0xf]
        %v327 = vld [vmem:[%s311 + $0x24] sm:$0xf]
        %v328 = vld [vmem:[%s311 + $0x28] sm:$0xf]
        %v329 = vld [vmem:[%s311 + $0x2c] sm:$0xf]
        %v330 = vld [vmem:[%s311 + $0x30] sm:$0xf]
        %v331 = vld [vmem:[%s311 + $0x34] sm:$0xf]
        %v332 = vld [vmem:[%s311 + $0x38] sm:$0xf]
        %v333 = vld [vmem:[%s311 + $0x3c] sm:$0xf]
        %v334 = vld [vmem:[%s316] sm:$0xf]
        %v335 = vld [vmem:[%s316 + $0x4] sm:$0xf]
        %v336 = vld [vmem:[%s316 + $0x8] sm:$0xf]
        %v337 = vld [vmem:[%s316 + $0xc] sm:$0xf]
        %v338 = vld [vmem:[%s316 + $0x10] sm:$0xf]
        %v339 = vld [vmem:[%s316 + $0x14] sm:$0xf]
        %v340 = vld [vmem:[%s316 + $0x18] sm:$0xf]
        %v341 = vld [vmem:[%s316 + $0x1c] sm:$0xf]
        %v342 = vld [vmem:[%s316 + $0x20] sm:$0xf]
        %v343 = vld [vmem:[%s316 + $0x24] sm:$0xf]
        %v344 = vld [vmem:[%s316 + $0x28] sm:$0xf]
        %v345 = vld [vmem:[%s316 + $0x2c] sm:$0xf]
        %v346 = vld [vmem:[%s316 + $0x30] sm:$0xf]
        %v347 = vld [vmem:[%s316 + $0x34] sm:$0xf]
        %v348 = vld [vmem:[%s316 + $0x38] sm:$0xf]
        %v349 = vld [vmem:[%s316 + $0x3c] sm:$0xf]
        %v366 = vunpack.c.l.b16 %v318
        %v367 = vunpack.c.l.b16 %v319
        %v368 = vunpack.c.l.b16 %v320
        %v369 = vunpack.c.l.b16 %v321
        %v370 = vunpack.c.l.b16 %v322
        %v371 = vunpack.c.l.b16 %v323
        %v372 = vunpack.c.l.b16 %v324
        %v373 = vunpack.c.l.b16 %v325
        %v374 = vunpack.c.l.b16 %v326
        %v375 = vunpack.c.l.b16 %v327
        %v376 = vunpack.c.l.b16 %v328
        %v377 = vunpack.c.l.b16 %v329
        %v378 = vunpack.c.l.b16 %v330
        %v379 = vunpack.c.l.b16 %v331
        %v380 = vunpack.c.l.b16 %v332
        %v381 = vunpack.c.l.b16 %v333
        %v382 = vpack.c.b16 %v367, %v366
        %v383 = vpack.c.b16 %v369, %v368
        %v384 = vpack.c.b16 %v371, %v370
        %v385 = vpack.c.b16 %v373, %v372
        %v386 = vpack.c.b16 %v375, %v374
        %v387 = vpack.c.b16 %v377, %v376
        %v388 = vpack.c.b16 %v379, %v378
        %v389 = vpack.c.b16 %v381, %v380
        %v414 = vunpack.c.l.b16 %v334
        %v415 = vunpack.c.l.b16 %v335
        %v416 = vunpack.c.l.b16 %v336
        %v417 = vunpack.c.l.b16 %v337
        %v418 = vunpack.c.l.b16 %v338
        %v419 = vunpack.c.l.b16 %v339
        %v420 = vunpack.c.l.b16 %v340
        %v421 = vunpack.c.l.b16 %v341
        %v422 = vunpack.c.l.b16 %v342
        %v423 = vunpack.c.l.b16 %v343
        %v424 = vunpack.c.l.b16 %v344
        %v425 = vunpack.c.l.b16 %v345
        %v426 = vunpack.c.l.b16 %v346
        %v427 = vunpack.c.l.b16 %v347
        %v428 = vunpack.c.l.b16 %v348
        %v429 = vunpack.c.l.b16 %v349
        %v430 = vpack.c.b16 %v415, %v414
        %v431 = vpack.c.b16 %v417, %v416
        %v432 = vpack.c.b16 %v419, %v418
        %v433 = vpack.c.b16 %v421, %v420
        %v434 = vpack.c.b16 %v423, %v422
        %v435 = vpack.c.b16 %v425, %v424
        %v436 = vpack.c.b16 %v427, %v426
        %v437 = vpack.c.b16 %v429, %v428
        %446 = vmatprep.subr.bf16.mxu0 0
        %447 = vmatpush1.bf16.msra.mxu0 %v430
        %448 = vmatprep.subr.bf16.mxu0 0
        %449 = vmatpush1.bf16.msra.mxu0 %v431
        %450 = vmatprep.subr.bf16.mxu0 0
        %451 = vmatpush1.bf16.msra.mxu0 %v432
        %452 = vmatprep.subr.bf16.mxu0 0
        %453 = vmatpush1.bf16.msra.mxu0 %v433
        %454 = vmatprep.subr.bf16.mxu0 0
        %455 = vmatpush1.bf16.msra.mxu0 %v434
        %456 = vmatprep.subr.bf16.mxu0 0
        %457 = vmatpush1.bf16.msra.mxu0 %v435
        %458 = vmatprep.subr.bf16.mxu0 0
        %459 = vmatpush1.bf16.msra.mxu0 %v436
        %460 = vmatprep.subr.bf16.mxu0 0
        %461 = vmatpush1.bf16.msra.mxu0 %v437
        %462 = vmatprep.subr.bf16.mxu0 0
        %463 = vmatpush1.bf16.msra.mxu0 0
        %464 = vmatprep.subr.bf16.mxu0 0
        %465 = vmatpush1.bf16.msra.mxu0 0
        %466 = vmatprep.subr.bf16.mxu0 0
        %467 = vmatpush1.bf16.msra.mxu0 0
        %468 = vmatprep.subr.bf16.mxu0 0
        %469 = vmatpush1.bf16.msra.mxu0 0
        %470 = vmatprep.subr.bf16.mxu0 0
        %471 = vmatpush1.bf16.msra.mxu0 0
        %472 = vmatprep.subr.bf16.mxu0 0
        %473 = vmatpush1.bf16.msra.mxu0 0
        %474 = vmatprep.subr.bf16.mxu0 0
        %475 = vmatpush1.bf16.msra.mxu0 0
        %476 = vmatprep.subr.bf16.mxu0 0
        %477 = vmatpush1.bf16.msra.mxu0 0
        %478 = vmatprep.mubr.bf16.mxu0 0
        %479 = vmatmul.mubr.bf16.gmra.mrb[0].mxu0 %v382
        %v480 = vpop.f32.mrb[0].mxu0
        %v481 = vadd.f32 0.0, %v480
        %v482 = vpop.f32.mrb[0].mxu0
        %v483 = vpop.f32.mrb[0].mxu0
        %v484 = vadd.f32 0.0, %v483
        %v485 = vpop.f32.mrb[0].mxu0
        %486 = vmatprep.mubr.bf16.mxu0 0
        %487 = vmatmul.mubr.bf16.gmra.mrb[0].mxu0 %v383
        %v488 = vpop.f32.mrb[0].mxu0
        %v489 = vadd.f32 0.0, %v488
        %v490 = vpop.f32.mrb[0].mxu0
        %v491 = vpop.f32.mrb[0].mxu0
        %v492 = vadd.f32 0.0, %v491
        %v493 = vpop.f32.mrb[0].mxu0
        %494 = vmatprep.mubr.bf16.mxu0 0
        %495 = vmatmul.mubr.bf16.gmra.mrb[0].mxu0 %v384
        %v496 = vpop.f32.mrb[0].mxu0
        %v497 = vadd.f32 0.0, %v496
        %v498 = vpop.f32.mrb[0].mxu0
        %v499 = vpop.f32.mrb[0].mxu0
        %v500 = vadd.f32 0.0, %v499
        %v501 = vpop.f32.mrb[0].mxu0
        %502 = vmatprep.mubr.bf16.mxu0 0
        %503 = vmatmul.mubr.bf16.gmra.mrb[0].mxu0 %v385
        %v504 = vpop.f32.mrb[0].mxu0
        %v505 = vadd.f32 0.0, %v504
        %v506 = vpop.f32.mrb[0].mxu0
        %v507 = vpop.f32.mrb[0].mxu0
        %v508 = vadd.f32 0.0, %v507
        %v509 = vpop.f32.mrb[0].mxu0
        %510 = vmatprep.mubr.bf16.mxu0 0
        %511 = vmatmul.mubr.bf16.gmra.mrb[0].mxu0 %v386
        %v512 = vpop.f32.mrb[0].mxu0
        %v513 = vadd.f32 0.0, %v512
        %v514 = vpop.f32.mrb[0].mxu0
        %v515 = vpop.f32.mrb[0].mxu0
        %v516 = vadd.f32 0.0, %v515
        %v517 = vpop.f32.mrb[0].mxu0
        %518 = vmatprep.mubr.bf16.mxu0 0
        %519 = vmatmul.mubr.bf16.gmra.mrb[0].mxu0 %v387
        %v520 = vpop.f32.mrb[0].mxu0
        %v521 = vadd.f32 0.0, %v520
        %v522 = vpop.f32.mrb[0].mxu0
        %v523 = vpop.f32.mrb[0].mxu0
        %v524 = vadd.f32 0.0, %v523
        %v525 = vpop.f32.mrb[0].mxu0
        %526 = vmatprep.mubr.bf16.mxu0 0
        %527 = vmatmul.mubr.bf16.gmra.mrb[0].mxu0 %v388
        %v528 = vpop.f32.mrb[0].mxu0
        %v529 = vadd.f32 0.0, %v528
        %v530 = vpop.f32.mrb[0].mxu0
        %v531 = vpop.f32.mrb[0].mxu0
        %v532 = vadd.f32 0.0, %v531
        %v533 = vpop.f32.mrb[0].mxu0
        %534 = vmatprep.mubr.bf16.mxu0 0
        %535 = vmatmul.mubr.bf16.gmra.mrb[0].mxu0 %v389
        %v536 = vpop.f32.mrb[0].mxu0
        %v537 = vadd.f32 0.0, %v536
        %v538 = vpop.f32.mrb[0].mxu0
        %v539 = vpop.f32.mrb[0].mxu0
        %v540 = vadd.f32 0.0, %v539
        %v541 = vpop.f32.mrb[0].mxu0
        %542 = vdwg.mxu0
        %v543 = vpack.c.bf16 %v484, %v481
        %v544 = vpack.c.bf16 %v492, %v489
        %v545 = vpack.c.bf16 %v500, %v497
        %v546 = vpack.c.bf16 %v508, %v505
        %v547 = vpack.c.bf16 %v516, %v513
        %v548 = vpack.c.bf16 %v524, %v521
        %v549 = vpack.c.bf16 %v532, %v529
        %v550 = vpack.c.bf16 %v540, %v537
        %v551 = vld [vmem:[%s4] sm:$0xf]
        %v552 = vld [vmem:[%s4 + $0x4] sm:$0xf]
        %v553 = vld [vmem:[%s4 + $0x8] sm:$0xf]
        %v554 = vld [vmem:[%s4 + $0xc] sm:$0xf]
        %v555 = vld [vmem:[%s4 + $0x10] sm:$0xf]
        %v556 = vld [vmem:[%s4 + $0x14] sm:$0xf]
        %v557 = vld [vmem:[%s4 + $0x18] sm:$0xf]
        %v558 = vld [vmem:[%s4 + $0x1c] sm:$0xf]
        %v567 = vunpack.c.l.b16 %v551
        %v568 = vunpack.c.l.b16 %v552
        %v569 = vunpack.c.l.b16 %v553
        %v570 = vunpack.c.l.b16 %v554
        %v571 = vunpack.c.l.b16 %v555
        %v572 = vunpack.c.l.b16 %v556
        %v573 = vunpack.c.l.b16 %v557
        %v574 = vunpack.c.l.b16 %v558
        %v575 = vpack.c.b16 %v568, %v567
        %v576 = vpack.c.b16 %v570, %v569
        %v577 = vpack.c.b16 %v572, %v571
        %v578 = vpack.c.b16 %v574, %v573
        %vm583 = vcmask 523264
        %v585 = vsel %vm583, %v543, 0
        %v588 = vsel %vm583, %v544, 0
        %v591 = vsel %vm583, %v545, 0
        %v594 = vsel %vm583, %v546, 0
        %v597 = vsel %vm583, %v547, 0
        %v600 = vsel %vm583, %v548, 0
        %v603 = vsel %vm583, %v549, 0
        %v606 = vsel %vm583, %v550, 0
        %608 = vmatprep.subr.bf16.mxu0 0
        %609 = vmatpush1.bf16.msra.mxu0 %v575
        %610 = vmatprep.subr.bf16.mxu0 0
        %611 = vmatpush1.bf16.msra.mxu0 %v576
        %612 = vmatprep.subr.bf16.mxu0 0
        %613 = vmatpush1.bf16.msra.mxu0 %v577
        %614 = vmatprep.subr.bf16.mxu0 0
        %615 = vmatpush1.bf16.msra.mxu0 %v578
        %616 = vmatprep.subr.bf16.mxu0 0
        %617 = vmatpush1.bf16.msra.mxu0 0
        %618 = vmatprep.subr.bf16.mxu0 0
        %619 = vmatpush1.bf16.msra.mxu0 0
        %620 = vmatprep.subr.bf16.mxu0 0
        %621 = vmatpush1.bf16.msra.mxu0 0
        %622 = vmatprep.subr.bf16.mxu0 0
        %623 = vmatpush1.bf16.msra.mxu0 0
        %624 = vmatprep.subr.bf16.mxu0 0
        %625 = vmatpush1.bf16.msra.mxu0 0
        %626 = vmatprep.subr.bf16.mxu0 0
        %627 = vmatpush1.bf16.msra.mxu0 0
        %628 = vmatprep.subr.bf16.mxu0 0
        %629 = vmatpush1.bf16.msra.mxu0 0
        %630 = vmatprep.subr.bf16.mxu0 0
        %631 = vmatpush1.bf16.msra.mxu0 0
        %632 = vmatprep.subr.bf16.mxu0 0
        %633 = vmatpush1.bf16.msra.mxu0 0
        %634 = vmatprep.subr.bf16.mxu0 0
        %635 = vmatpush1.bf16.msra.mxu0 0
        %636 = vmatprep.subr.bf16.mxu0 0
        %637 = vmatpush1.bf16.msra.mxu0 0
        %638 = vmatprep.subr.bf16.mxu0 0
        %639 = vmatpush1.bf16.msra.mxu0 0
        %640 = vmatprep.mubr.bf16.mxu0 0
        %641 = vmatmul.mubr.bf16.gmra.mrb[0].mxu0 %v585
        %v642 = vpop.f32.mrb[0].mxu0
        %v643 = vadd.f32 0.0, %v642
        %v644 = vpop.f32.mrb[0].mxu0
        %v645 = vpop.f32.mrb[0].mxu0
        %v646 = vadd.f32 0.0, %v645
        %v647 = vpop.f32.mrb[0].mxu0
        %648 = vmatprep.mubr.bf16.mxu0 0
        %649 = vmatmul.mubr.bf16.gmra.mrb[0].mxu0 %v588
        %v650 = vpop.f32.mrb[0].mxu0
        %v651 = vadd.f32 0.0, %v650
        %v652 = vpop.f32.mrb[0].mxu0
        %v653 = vpop.f32.mrb[0].mxu0
        %v654 = vadd.f32 0.0, %v653
        %v655 = vpop.f32.mrb[0].mxu0
        %656 = vmatprep.mubr.bf16.mxu0 0
        %657 = vmatmul.mubr.bf16.gmra.mrb[0].mxu0 %v591
        %v658 = vpop.f32.mrb[0].mxu0
        %v659 = vadd.f32 0.0, %v658
        %v660 = vpop.f32.mrb[0].mxu0
        %v661 = vpop.f32.mrb[0].mxu0
        %v662 = vadd.f32 0.0, %v661
        %v663 = vpop.f32.mrb[0].mxu0
        %664 = vmatprep.mubr.bf16.mxu0 0
        %665 = vmatmul.mubr.bf16.gmra.mrb[0].mxu0 %v594
        %v666 = vpop.f32.mrb[0].mxu0
        %v667 = vadd.f32 0.0, %v666
        %v668 = vpop.f32.mrb[0].mxu0
        %v669 = vpop.f32.mrb[0].mxu0
        %v670 = vadd.f32 0.0, %v669
        %v671 = vpop.f32.mrb[0].mxu0
        %672 = vmatprep.mubr.bf16.mxu0 0
        %673 = vmatmul.mubr.bf16.gmra.mrb[0].mxu0 %v597
        %v674 = vpop.f32.mrb[0].mxu0
        %v675 = vadd.f32 0.0, %v674
        %v676 = vpop.f32.mrb[0].mxu0
        %v677 = vpop.f32.mrb[0].mxu0
        %v678 = vadd.f32 0.0, %v677
        %v679 = vpop.f32.mrb[0].mxu0
        %680 = vmatprep.mubr.bf16.mxu0 0
        %681 = vmatmul.mubr.bf16.gmra.mrb[0].mxu0 %v600
        %v682 = vpop.f32.mrb[0].mxu0
        %v683 = vadd.f32 0.0, %v682
        %v684 = vpop.f32.mrb[0].mxu0
        %v685 = vpop.f32.mrb[0].mxu0
        %v686 = vadd.f32 0.0, %v685
        %v687 = vpop.f32.mrb[0].mxu0
        %688 = vmatprep.mubr.bf16.mxu0 0
        %689 = vmatmul.mubr.bf16.gmra.mrb[0].mxu0 %v603
        %v690 = vpop.f32.mrb[0].mxu0
        %v691 = vadd.f32 0.0, %v690
        %v692 = vpop.f32.mrb[0].mxu0
        %v693 = vpop.f32.mrb[0].mxu0
        %v694 = vadd.f32 0.0, %v693
        %v695 = vpop.f32.mrb[0].mxu0
        %696 = vmatprep.mubr.bf16.mxu0 0
        %697 = vmatmul.mubr.bf16.gmra.mrb[0].mxu0 %v606
        %v698 = vpop.f32.mrb[0].mxu0
        %v699 = vadd.f32 0.0, %v698
        %v700 = vpop.f32.mrb[0].mxu0
        %v701 = vpop.f32.mrb[0].mxu0
        %v702 = vadd.f32 0.0, %v701
        %v703 = vpop.f32.mrb[0].mxu0
        %704 = vdwg.mxu0
        %v705 = vld [vmem:[%s3] sm:$0xff]
        %v706 = vld [vmem:[%s3 + $0x8] sm:$0xff]
        %v707 = vld [vmem:[%s3 + $0x10] sm:$0xff]
        %v708 = vld [vmem:[%s3 + $0x18] sm:$0xff]
        %v709 = vld [vmem:[%s3 + $0x20] sm:$0xff]
        %v710 = vld [vmem:[%s3 + $0x28] sm:$0xff]
        %v711 = vld [vmem:[%s3 + $0x30] sm:$0xff]
        %v712 = vld [vmem:[%s3 + $0x38] sm:$0xff]
        %v713 = vld [vmem:[%s3 + $0x40] sm:$0xff]
        %v714 = vld [vmem:[%s3 + $0x48] sm:$0xff]
        %v715 = vld [vmem:[%s3 + $0x50] sm:$0xff]
        %v716 = vld [vmem:[%s3 + $0x58] sm:$0xff]
        %v717 = vld [vmem:[%s3 + $0x60] sm:$0xff]
        %v718 = vld [vmem:[%s3 + $0x68] sm:$0xff]
        %v719 = vld [vmem:[%s3 + $0x70] sm:$0xff]
        %v720 = vld [vmem:[%s3 + $0x78] sm:$0xff]
        %722 = vset.pattern.permute.xlu0 0
        %723 = vperm.xlu0 %722, %v705
        %v724 = vpop.permute.xlu0 %723
        %727 = vset.pattern.permute.xlu0 0
        %728 = vperm.xlu0 %727, %v706
        %v729 = vpop.permute.xlu0 %728
        %732 = vset.pattern.permute.xlu0 0
        %733 = vperm.xlu0 %732, %v707
        %v734 = vpop.permute.xlu0 %733
        %737 = vset.pattern.permute.xlu0 0
        %738 = vperm.xlu0 %737, %v708
        %v739 = vpop.permute.xlu0 %738
        %742 = vset.pattern.permute.xlu0 0
        %743 = vperm.xlu0 %742, %v709
        %v744 = vpop.permute.xlu0 %743
        %747 = vset.pattern.permute.xlu0 0
        %748 = vperm.xlu0 %747, %v710
        %v749 = vpop.permute.xlu0 %748
        %752 = vset.pattern.permute.xlu0 0
        %753 = vperm.xlu0 %752, %v711
        %v754 = vpop.permute.xlu0 %753
        %757 = vset.pattern.permute.xlu0 0
        %758 = vperm.xlu0 %757, %v712
        %v759 = vpop.permute.xlu0 %758
        %762 = vset.pattern.permute.xlu0 0
        %763 = vperm.xlu0 %762, %v713
        %v764 = vpop.permute.xlu0 %763
        %767 = vset.pattern.permute.xlu0 0
        %768 = vperm.xlu0 %767, %v714
        %v769 = vpop.permute.xlu0 %768
        %772 = vset.pattern.permute.xlu0 0
        %773 = vperm.xlu0 %772, %v715
        %v774 = vpop.permute.xlu0 %773
        %777 = vset.pattern.permute.xlu0 0
        %778 = vperm.xlu0 %777, %v716
        %v779 = vpop.permute.xlu0 %778
        %782 = vset.pattern.permute.xlu0 0
        %783 = vperm.xlu0 %782, %v717
        %v784 = vpop.permute.xlu0 %783
        %787 = vset.pattern.permute.xlu0 0
        %788 = vperm.xlu0 %787, %v718
        %v789 = vpop.permute.xlu0 %788
        %792 = vset.pattern.permute.xlu0 0
        %793 = vperm.xlu0 %792, %v719
        %v794 = vpop.permute.xlu0 %793
        %797 = vset.pattern.permute.xlu0 0
        %798 = vperm.xlu0 %797, %v720
        %v799 = vpop.permute.xlu0 %798
        %v801 = vmul.f32 %v724, %v643
        %v802 = vmul.f32 %v729, %v646
        %v803 = vmul.f32 %v734, %v651
        %v804 = vmul.f32 %v739, %v654
        %v805 = vmul.f32 %v744, %v659
        %v806 = vmul.f32 %v749, %v662
        %v807 = vmul.f32 %v754, %v667
        %v808 = vmul.f32 %v759, %v670
        %v809 = vmul.f32 %v764, %v675
        %v810 = vmul.f32 %v769, %v678
        %v811 = vmul.f32 %v774, %v683
        %v812 = vmul.f32 %v779, %v686
        %v813 = vmul.f32 %v784, %v691
        %v814 = vmul.f32 %v789, %v694
        %v815 = vmul.f32 %v794, %v699
        %v816 = vmul.f32 %v799, %v702
        %v817 = vld [vmem:[%s306] sm:$0xf]
        %v818 = vld [vmem:[%s306 + $0x4] sm:$0xf]
        %v819 = vld [vmem:[%s306 + $0x8] sm:$0xf]
        %v820 = vld [vmem:[%s306 + $0xc] sm:$0xf]
        %v821 = vld [vmem:[%s306 + $0x10] sm:$0xf]
        %v822 = vld [vmem:[%s306 + $0x14] sm:$0xf]
        %v823 = vld [vmem:[%s306 + $0x18] sm:$0xf]
        %v824 = vld [vmem:[%s306 + $0x1c] sm:$0xf]
        %v825 = vld [vmem:[%s306 + $0x20] sm:$0xf]
        %v826 = vld [vmem:[%s306 + $0x24] sm:$0xf]
        %v827 = vld [vmem:[%s306 + $0x28] sm:$0xf]
        %v828 = vld [vmem:[%s306 + $0x2c] sm:$0xf]
        %v829 = vld [vmem:[%s306 + $0x30] sm:$0xf]
        %v830 = vld [vmem:[%s306 + $0x34] sm:$0xf]
        %v831 = vld [vmem:[%s306 + $0x38] sm:$0xf]
        %v832 = vld [vmem:[%s306 + $0x3c] sm:$0xf]
        %v833 = vpack.c.bf16 %v802, %v801
        %v834 = vpack.c.bf16 %v804, %v803
        %v835 = vpack.c.bf16 %v806, %v805
        %v836 = vpack.c.bf16 %v808, %v807
        %v837 = vpack.c.bf16 %v810, %v809
        %v838 = vpack.c.bf16 %v812, %v811
        %v839 = vpack.c.bf16 %v814, %v813
        %v840 = vpack.c.bf16 %v816, %v815
        %v857 = vunpack.c.l.b16 %v817
        %v858 = vunpack.c.l.b16 %v818
        %v859 = vunpack.c.l.b16 %v819
        %v860 = vunpack.c.l.b16 %v820
        %v861 = vunpack.c.l.b16 %v821
        %v862 = vunpack.c.l.b16 %v822
        %v863 = vunpack.c.l.b16 %v823
        %v864 = vunpack.c.l.b16 %v824
        %v865 = vunpack.c.l.b16 %v825
        %v866 = vunpack.c.l.b16 %v826
        %v867 = vunpack.c.l.b16 %v827
        %v868 = vunpack.c.l.b16 %v828
        %v869 = vunpack.c.l.b16 %v829
        %v870 = vunpack.c.l.b16 %v830
        %v871 = vunpack.c.l.b16 %v831
        %v872 = vunpack.c.l.b16 %v832
        %v873 = vpack.c.b16 %v858, %v857
        %v874 = vpack.c.b16 %v860, %v859
        %v875 = vpack.c.b16 %v862, %v861
        %v876 = vpack.c.b16 %v864, %v863
        %v877 = vpack.c.b16 %v866, %v865
        %v878 = vpack.c.b16 %v868, %v867
        %v879 = vpack.c.b16 %v870, %v869
        %v880 = vpack.c.b16 %v872, %v871
        %889 = vmatprep.subr.bf16.mxu0 0
        %890 = vmatpush1.bf16.msra.mxu0 %v833
        %891 = vmatprep.subr.bf16.mxu0 0
        %892 = vmatpush1.bf16.msra.mxu0 %v834
        %893 = vmatprep.subr.bf16.mxu0 0
        %894 = vmatpush1.bf16.msra.mxu0 %v835
        %895 = vmatprep.subr.bf16.mxu0 0
        %896 = vmatpush1.bf16.msra.mxu0 %v836
        %897 = vmatprep.subr.bf16.mxu0 0
        %898 = vmatpush1.bf16.msra.mxu0 %v837
        %899 = vmatprep.subr.bf16.mxu0 0
        %900 = vmatpush1.bf16.msra.mxu0 %v838
        %901 = vmatprep.subr.bf16.mxu0 0
        %902 = vmatpush1.bf16.msra.mxu0 %v839
        %903 = vmatprep.subr.bf16.mxu0 0
        %904 = vmatpush1.bf16.msra.mxu0 %v840
        %905 = vmatprep.subr.bf16.mxu0 0
        %906 = vmatpush1.bf16.msra.mxu0 0
        %907 = vmatprep.subr.bf16.mxu0 0
        %908 = vmatpush1.bf16.msra.mxu0 0
        %909 = vmatprep.subr.bf16.mxu0 0
        %910 = vmatpush1.bf16.msra.mxu0 0
        %911 = vmatprep.subr.bf16.mxu0 0
        %912 = vmatpush1.bf16.msra.mxu0 0
        %913 = vmatprep.subr.bf16.mxu0 0
        %914 = vmatpush1.bf16.msra.mxu0 0
        %915 = vmatprep.subr.bf16.mxu0 0
        %916 = vmatpush1.bf16.msra.mxu0 0
        %917 = vmatprep.subr.bf16.mxu0 0
        %918 = vmatpush1.bf16.msra.mxu0 0
        %919 = vmatprep.subr.bf16.mxu0 0
        %920 = vmatpush1.bf16.msra.mxu0 0
        %921 = vmatprep.mubr.bf16.mxu0 0
        %922 = vmatmul.mubr.bf16.gmra.mrb[0].mxu0 %v873
        %v923 = vpop.f32.mrb[0].mxu0
        %v924 = vadd.f32 0.0, %v923
        %v925 = vpop.f32.mrb[0].mxu0
        %v926 = vpop.f32.mrb[0].mxu0
        %v927 = vadd.f32 0.0, %v926
        %v928 = vpop.f32.mrb[0].mxu0
        %929 = vmatprep.mubr.bf16.mxu0 0
        %930 = vmatmul.mubr.bf16.gmra.mrb[0].mxu0 %v874
        %v931 = vpop.f32.mrb[0].mxu0
        %v932 = vadd.f32 0.0, %v931
        %v933 = vpop.f32.mrb[0].mxu0
        %v934 = vpop.f32.mrb[0].mxu0
        %v935 = vadd.f32 0.0, %v934
        %v936 = vpop.f32.mrb[0].mxu0
        %937 = vmatprep.mubr.bf16.mxu0 0
        %938 = vmatmul.mubr.bf16.gmra.mrb[0].mxu0 %v875
        %v939 = vpop.f32.mrb[0].mxu0
        %v940 = vadd.f32 0.0, %v939
        %v941 = vpop.f32.mrb[0].mxu0
        %v942 = vpop.f32.mrb[0].mxu0
        %v943 = vadd.f32 0.0, %v942
        %v944 = vpop.f32.mrb[0].mxu0
        %945 = vmatprep.mubr.bf16.mxu0 0
        %946 = vmatmul.mubr.bf16.gmra.mrb[0].mxu0 %v876
        %v947 = vpop.f32.mrb[0].mxu0
        %v948 = vadd.f32 0.0, %v947
        %v949 = vpop.f32.mrb[0].mxu0
        %v950 = vpop.f32.mrb[0].mxu0
        %v951 = vadd.f32 0.0, %v950
        %v952 = vpop.f32.mrb[0].mxu0
        %953 = vmatprep.mubr.bf16.mxu0 0
        %954 = vmatmul.mubr.bf16.gmra.mrb[0].mxu0 %v877
        %v955 = vpop.f32.mrb[0].mxu0
        %v956 = vadd.f32 0.0, %v955
        %v957 = vpop.f32.mrb[0].mxu0
        %v958 = vpop.f32.mrb[0].mxu0
        %v959 = vadd.f32 0.0, %v958
        %v960 = vpop.f32.mrb[0].mxu0
        %961 = vmatprep.mubr.bf16.mxu0 0
        %962 = vmatmul.mubr.bf16.gmra.mrb[0].mxu0 %v878
        %v963 = vpop.f32.mrb[0].mxu0
        %v964 = vadd.f32 0.0, %v963
        %v965 = vpop.f32.mrb[0].mxu0
        %v966 = vpop.f32.mrb[0].mxu0
        %v967 = vadd.f32 0.0, %v966
        %v968 = vpop.f32.mrb[0].mxu0
        %969 = vmatprep.mubr.bf16.mxu0 0
        %970 = vmatmul.mubr.bf16.gmra.mrb[0].mxu0 %v879
        %v971 = vpop.f32.mrb[0].mxu0
        %v972 = vadd.f32 0.0, %v971
        %v973 = vpop.f32.mrb[0].mxu0
        %v974 = vpop.f32.mrb[0].mxu0
        %v975 = vadd.f32 0.0, %v974
        %v976 = vpop.f32.mrb[0].mxu0
        %977 = vmatprep.mubr.bf16.mxu0 0
        %978 = vmatmul.mubr.bf16.gmra.mrb[0].mxu0 %v880
        %v979 = vpop.f32.mrb[0].mxu0
        %v980 = vadd.f32 0.0, %v979
        %v981 = vpop.f32.mrb[0].mxu0
        %v982 = vpop.f32.mrb[0].mxu0
        %v983 = vadd.f32 0.0, %v982
        %v984 = vpop.f32.mrb[0].mxu0
        %985 = vdwg.mxu0
        %v986 = vmax.f32 %v924, 0.0
        %v987 = vmax.f32 %v927, 0.0
        %v988 = vmax.f32 %v932, 0.0
        %v989 = vmax.f32 %v935, 0.0
        %v990 = vmax.f32 %v940, 0.0
        %v991 = vmax.f32 %v943, 0.0
        %v992 = vmax.f32 %v948, 0.0
        %v993 = vmax.f32 %v951, 0.0
        %v994 = vmax.f32 %v956, 0.0
        %v995 = vmax.f32 %v959, 0.0
        %v996 = vmax.f32 %v964, 0.0
        %v997 = vmax.f32 %v967, 0.0
        %v998 = vmax.f32 %v972, 0.0
        %v999 = vmax.f32 %v975, 0.0
        %v1000 = vmax.f32 %v980, 0.0
        %v1001 = vmax.f32 %v983, 0.0
        %v1002 = vpack.c.bf16 %v987, %v986
        %v1003 = vpack.c.bf16 %v989, %v988
        %v1004 = vpack.c.bf16 %v991, %v990
        %v1005 = vpack.c.bf16 %v993, %v992
        %v1006 = vpack.c.bf16 %v995, %v994
        %v1007 = vpack.c.bf16 %v997, %v996
        %v1008 = vpack.c.bf16 %v999, %v998
        %v1009 = vpack.c.bf16 %v1001, %v1000
        %v1010 = vld [vmem:[%s6] sm:$0xf]
        %v1011 = vld [vmem:[%s6 + $0x4] sm:$0xf]
        %v1012 = vld [vmem:[%s6 + $0x8] sm:$0xf]
        %v1013 = vld [vmem:[%s6 + $0xc] sm:$0xf]
        %v1014 = vld [vmem:[%s6 + $0x10] sm:$0xf]
        %v1015 = vld [vmem:[%s6 + $0x14] sm:$0xf]
        %v1016 = vld [vmem:[%s6 + $0x18] sm:$0xf]
        %v1017 = vld [vmem:[%s6 + $0x1c] sm:$0xf]
        %v1018 = vld [vmem:[%s6 + $0x20] sm:$0xf]
        %v1019 = vld [vmem:[%s6 + $0x24] sm:$0xf]
        %v1020 = vld [vmem:[%s6 + $0x28] sm:$0xf]
        %v1021 = vld [vmem:[%s6 + $0x2c] sm:$0xf]
        %v1022 = vld [vmem:[%s6 + $0x30] sm:$0xf]
        %v1023 = vld [vmem:[%s6 + $0x34] sm:$0xf]
        %v1024 = vld [vmem:[%s6 + $0x38] sm:$0xf]
        %v1025 = vld [vmem:[%s6 + $0x3c] sm:$0xf]
        %v1042 = vunpack.c.l.b16 %v1010
        %v1043 = vunpack.c.l.b16 %v1011
        %v1044 = vunpack.c.l.b16 %v1012
        %v1045 = vunpack.c.l.b16 %v1013
        %v1046 = vunpack.c.l.b16 %v1014
        %v1047 = vunpack.c.l.b16 %v1015
        %v1048 = vunpack.c.l.b16 %v1016
        %v1049 = vunpack.c.l.b16 %v1017
        %v1050 = vunpack.c.l.b16 %v1018
        %v1051 = vunpack.c.l.b16 %v1019
        %v1052 = vunpack.c.l.b16 %v1020
        %v1053 = vunpack.c.l.b16 %v1021
        %v1054 = vunpack.c.l.b16 %v1022
        %v1055 = vunpack.c.l.b16 %v1023
        %v1056 = vunpack.c.l.b16 %v1024
        %v1057 = vunpack.c.l.b16 %v1025
        %v1058 = vpack.c.b16 %v1043, %v1042
        %v1059 = vpack.c.b16 %v1045, %v1044
        %v1060 = vpack.c.b16 %v1047, %v1046
        %v1061 = vpack.c.b16 %v1049, %v1048
        %v1062 = vpack.c.b16 %v1051, %v1050
        %v1063 = vpack.c.b16 %v1053, %v1052
        %v1064 = vpack.c.b16 %v1055, %v1054
        %v1065 = vpack.c.b16 %v1057, %v1056
        %1074 = vmatprep.subr.bf16.mxu0 0
        %1075 = vmatpush1.bf16.msra.mxu0 %v1058
        %1076 = vmatprep.subr.bf16.mxu0 0
        %1077 = vmatpush1.bf16.msra.mxu0 %v1059
        %1078 = vmatprep.subr.bf16.mxu0 0
        %1079 = vmatpush1.bf16.msra.mxu0 %v1060
        %1080 = vmatprep.subr.bf16.mxu0 0
        %1081 = vmatpush1.bf16.msra.mxu0 %v1061
        %1082 = vmatprep.subr.bf16.mxu0 0
        %1083 = vmatpush1.bf16.msra.mxu0 %v1062
        %1084 = vmatprep.subr.bf16.mxu0 0
        %1085 = vmatpush1.bf16.msra.mxu0 %v1063
        %1086 = vmatprep.subr.bf16.mxu0 0
        %1087 = vmatpush1.bf16.msra.mxu0 %v1064
        %1088 = vmatprep.subr.bf16.mxu0 0
        %1089 = vmatpush1.bf16.msra.mxu0 %v1065
        %1090 = vmatprep.subr.bf16.mxu0 0
        %1091 = vmatpush1.bf16.msra.mxu0 0
        %1092 = vmatprep.subr.bf16.mxu0 0
        %1093 = vmatpush1.bf16.msra.mxu0 0
        %1094 = vmatprep.subr.bf16.mxu0 0
        %1095 = vmatpush1.bf16.msra.mxu0 0
        %1096 = vmatprep.subr.bf16.mxu0 0
        %1097 = vmatpush1.bf16.msra.mxu0 0
        %1098 = vmatprep.subr.bf16.mxu0 0
        %1099 = vmatpush1.bf16.msra.mxu0 0
        %1100 = vmatprep.subr.bf16.mxu0 0
        %1101 = vmatpush1.bf16.msra.mxu0 0
        %1102 = vmatprep.subr.bf16.mxu0 0
        %1103 = vmatpush1.bf16.msra.mxu0 0
        %1104 = vmatprep.subr.bf16.mxu0 0
        %1105 = vmatpush1.bf16.msra.mxu0 0
        %1106 = vmatprep.mubr.bf16.mxu0 0
        %1107 = vmatmul.mubr.bf16.gmra.mrb[0].mxu0 %v1002
        %v1108 = vpop.f32.mrb[0].mxu0
        %v1109 = vadd.f32 0.0, %v1108
        %v1110 = vpop.f32.mrb[0].mxu0
        %v1111 = vpop.f32.mrb[0].mxu0
        %v1112 = vadd.f32 0.0, %v1111
        %v1113 = vpop.f32.mrb[0].mxu0
        %1114 = vmatprep.mubr.bf16.mxu0 0
        %1115 = vmatmul.mubr.bf16.gmra.mrb[0].mxu0 %v1003
        %v1116 = vpop.f32.mrb[0].mxu0
        %v1117 = vadd.f32 0.0, %v1116
        %v1118 = vpop.f32.mrb[0].mxu0
        %v1119 = vpop.f32.mrb[0].mxu0
        %v1120 = vadd.f32 0.0, %v1119
        %v1121 = vpop.f32.mrb[0].mxu0
        %1122 = vmatprep.mubr.bf16.mxu0 0
        %1123 = vmatmul.mubr.bf16.gmra.mrb[0].mxu0 %v1004
        %v1124 = vpop.f32.mrb[0].mxu0
        %v1125 = vadd.f32 0.0, %v1124
        %v1126 = vpop.f32.mrb[0].mxu0
        %v1127 = vpop.f32.mrb[0].mxu0
        %v1128 = vadd.f32 0.0, %v1127
        %v1129 = vpop.f32.mrb[0].mxu0
        %1130 = vmatprep.mubr.bf16.mxu0 0
        %1131 = vmatmul.mubr.bf16.gmra.mrb[0].mxu0 %v1005
        %v1132 = vpop.f32.mrb[0].mxu0
        %v1133 = vadd.f32 0.0, %v1132
        %v1134 = vpop.f32.mrb[0].mxu0
        %v1135 = vpop.f32.mrb[0].mxu0
        %v1136 = vadd.f32 0.0, %v1135
        %v1137 = vpop.f32.mrb[0].mxu0
        %1138 = vmatprep.mubr.bf16.mxu0 0
        %1139 = vmatmul.mubr.bf16.gmra.mrb[0].mxu0 %v1006
        %v1140 = vpop.f32.mrb[0].mxu0
        %v1141 = vadd.f32 0.0, %v1140
        %v1142 = vpop.f32.mrb[0].mxu0
        %v1143 = vpop.f32.mrb[0].mxu0
        %v1144 = vadd.f32 0.0, %v1143
        %v1145 = vpop.f32.mrb[0].mxu0
        %1146 = vmatprep.mubr.bf16.mxu0 0
        %1147 = vmatmul.mubr.bf16.gmra.mrb[0].mxu0 %v1007
        %v1148 = vpop.f32.mrb[0].mxu0
        %v1149 = vadd.f32 0.0, %v1148
        %v1150 = vpop.f32.mrb[0].mxu0
        %v1151 = vpop.f32.mrb[0].mxu0
        %v1152 = vadd.f32 0.0, %v1151
        %v1153 = vpop.f32.mrb[0].mxu0
        %1154 = vmatprep.mubr.bf16.mxu0 0
        %1155 = vmatmul.mubr.bf16.gmra.mrb[0].mxu0 %v1008
        %v1156 = vpop.f32.mrb[0].mxu0
        %v1157 = vadd.f32 0.0, %v1156
        %v1158 = vpop.f32.mrb[0].mxu0
        %v1159 = vpop.f32.mrb[0].mxu0
        %v1160 = vadd.f32 0.0, %v1159
        %v1161 = vpop.f32.mrb[0].mxu0
        %1162 = vmatprep.mubr.bf16.mxu0 0
        %1163 = vmatmul.mubr.bf16.gmra.mrb[0].mxu0 %v1009
        %v1164 = vpop.f32.mrb[0].mxu0
        %v1165 = vadd.f32 0.0, %v1164
        %v1166 = vpop.f32.mrb[0].mxu0
        %v1167 = vpop.f32.mrb[0].mxu0
        %v1168 = vadd.f32 0.0, %v1167
        %v1169 = vpop.f32.mrb[0].mxu0
        %1170 = vdwg.mxu0
        %v1171 = vpack.c.bf16 %v1112, %v1109
        %v1172 = vpack.c.bf16 %v1120, %v1117
        %v1173 = vpack.c.bf16 %v1128, %v1125
        %v1174 = vpack.c.bf16 %v1136, %v1133
        %v1175 = vpack.c.bf16 %v1144, %v1141
        %v1176 = vpack.c.bf16 %v1152, %v1149
        %v1177 = vpack.c.bf16 %v1160, %v1157
        %v1178 = vpack.c.bf16 %v1168, %v1165
        %1179 = vmatprep.subr.bf16.mxu0 0
        %1180 = vmatpush1.bf16.msra.mxu0 %v1171
        %1181 = vmatprep.subr.bf16.mxu0 0
        %1182 = vmatpush1.bf16.msra.mxu0 %v1172
        %1183 = vmatprep.subr.bf16.mxu0 0
        %1184 = vmatpush1.bf16.msra.mxu0 %v1173
        %1185 = vmatprep.subr.bf16.mxu0 0
        %1186 = vmatpush1.bf16.msra.mxu0 %v1174
        %1187 = vmatprep.subr.bf16.mxu0 0
        %1188 = vmatpush1.bf16.msra.mxu0 %v1175
        %1189 = vmatprep.subr.bf16.mxu0 0
        %1190 = vmatpush1.bf16.msra.mxu0 %v1176
        %1191 = vmatprep.subr.bf16.mxu0 0
        %1192 = vmatpush1.bf16.msra.mxu0 %v1177
        %1193 = vmatprep.subr.bf16.mxu0 0
        %1194 = vmatpush1.bf16.msra.mxu0 %v1178
        %1195 = vmatprep.subr.bf16.mxu0 0
        %1196 = vmatpush1.bf16.msra.mxu0 0
        %1197 = vmatprep.subr.bf16.mxu0 0
        %1198 = vmatpush1.bf16.msra.mxu0 0
        %1199 = vmatprep.subr.bf16.mxu0 0
        %1200 = vmatpush1.bf16.msra.mxu0 0
        %1201 = vmatprep.subr.bf16.mxu0 0
        %1202 = vmatpush1.bf16.msra.mxu0 0
        %1203 = vmatprep.subr.bf16.mxu0 0
        %1204 = vmatpush1.bf16.msra.mxu0 0
        %1205 = vmatprep.subr.bf16.mxu0 0
        %1206 = vmatpush1.bf16.msra.mxu0 0
        %1207 = vmatprep.subr.bf16.mxu0 0
        %1208 = vmatpush1.bf16.msra.mxu0 0
        %1209 = vmatprep.subr.bf16.mxu0 0
        %1210 = vmatpush1.bf16.msra.mxu0 0
        %1211 = vmatprep.mubr.bf16.mxu0 0
        %1212 = vmatmul.mubr.bf16.gmra.mrb[0].mxu0 %v382
        %v1213 = vpop.f32.mrb[0].mxu0
        %v1214 = vadd.f32 0.0, %v1213
        %v1215 = vpop.f32.mrb[0].mxu0
        %v1216 = vpop.f32.mrb[0].mxu0
        %v1217 = vadd.f32 0.0, %v1216
        %v1218 = vpop.f32.mrb[0].mxu0
        %1219 = vmatprep.mubr.bf16.mxu0 0
        %1220 = vmatmul.mubr.bf16.gmra.mrb[0].mxu0 %v383
        %v1221 = vpop.f32.mrb[0].mxu0
        %v1222 = vadd.f32 0.0, %v1221
        %v1223 = vpop.f32.mrb[0].mxu0
        %v1224 = vpop.f32.mrb[0].mxu0
        %v1225 = vadd.f32 0.0, %v1224
        %v1226 = vpop.f32.mrb[0].mxu0
        %1227 = vmatprep.mubr.bf16.mxu0 0
        %1228 = vmatmul.mubr.bf16.gmra.mrb[0].mxu0 %v384
        %v1229 = vpop.f32.mrb[0].mxu0
        %v1230 = vadd.f32 0.0, %v1229
        %v1231 = vpop.f32.mrb[0].mxu0
        %v1232 = vpop.f32.mrb[0].mxu0
        %v1233 = vadd.f32 0.0, %v1232
        %v1234 = vpop.f32.mrb[0].mxu0
        %1235 = vmatprep.mubr.bf16.mxu0 0
        %1236 = vmatmul.mubr.bf16.gmra.mrb[0].mxu0 %v385
        %v1237 = vpop.f32.mrb[0].mxu0
        %v1238 = vadd.f32 0.0, %v1237
        %v1239 = vpop.f32.mrb[0].mxu0
        %v1240 = vpop.f32.mrb[0].mxu0
        %v1241 = vadd.f32 0.0, %v1240
        %v1242 = vpop.f32.mrb[0].mxu0
        %1243 = vmatprep.mubr.bf16.mxu0 0
        %1244 = vmatmul.mubr.bf16.gmra.mrb[0].mxu0 %v386
        %v1245 = vpop.f32.mrb[0].mxu0
        %v1246 = vadd.f32 0.0, %v1245
        %v1247 = vpop.f32.mrb[0].mxu0
        %v1248 = vpop.f32.mrb[0].mxu0
        %v1249 = vadd.f32 0.0, %v1248
        %v1250 = vpop.f32.mrb[0].mxu0
        %1251 = vmatprep.mubr.bf16.mxu0 0
        %1252 = vmatmul.mubr.bf16.gmra.mrb[0].mxu0 %v387
        %v1253 = vpop.f32.mrb[0].mxu0
        %v1254 = vadd.f32 0.0, %v1253
        %v1255 = vpop.f32.mrb[0].mxu0
        %v1256 = vpop.f32.mrb[0].mxu0
        %v1257 = vadd.f32 0.0, %v1256
        %v1258 = vpop.f32.mrb[0].mxu0
        %1259 = vmatprep.mubr.bf16.mxu0 0
        %1260 = vmatmul.mubr.bf16.gmra.mrb[0].mxu0 %v388
        %v1261 = vpop.f32.mrb[0].mxu0
        %v1262 = vadd.f32 0.0, %v1261
        %v1263 = vpop.f32.mrb[0].mxu0
        %v1264 = vpop.f32.mrb[0].mxu0
        %v1265 = vadd.f32 0.0, %v1264
        %v1266 = vpop.f32.mrb[0].mxu0
        %1267 = vmatprep.mubr.bf16.mxu0 0
        %1268 = vmatmul.mubr.bf16.gmra.mrb[0].mxu0 %v389
        %v1269 = vpop.f32.mrb[0].mxu0
        %v1270 = vadd.f32 0.0, %v1269
        %v1271 = vpop.f32.mrb[0].mxu0
        %v1272 = vpop.f32.mrb[0].mxu0
        %v1273 = vadd.f32 0.0, %v1272
        %v1274 = vpop.f32.mrb[0].mxu0
        %1275 = vdwg.mxu0
        %v1276 = vld [vmem:[%s5] sm:$0xff]
        %v1277 = vld [vmem:[%s5 + $0x8] sm:$0xff]
        %v1278 = vld [vmem:[%s5 + $0x10] sm:$0xff]
        %v1279 = vld [vmem:[%s5 + $0x18] sm:$0xff]
        %v1280 = vld [vmem:[%s5 + $0x20] sm:$0xff]
        %v1281 = vld [vmem:[%s5 + $0x28] sm:$0xff]
        %v1282 = vld [vmem:[%s5 + $0x30] sm:$0xff]
        %v1283 = vld [vmem:[%s5 + $0x38] sm:$0xff]
        %v1284 = vld [vmem:[%s5 + $0x40] sm:$0xff]
        %v1285 = vld [vmem:[%s5 + $0x48] sm:$0xff]
        %v1286 = vld [vmem:[%s5 + $0x50] sm:$0xff]
        %v1287 = vld [vmem:[%s5 + $0x58] sm:$0xff]
        %v1288 = vld [vmem:[%s5 + $0x60] sm:$0xff]
        %v1289 = vld [vmem:[%s5 + $0x68] sm:$0xff]
        %v1290 = vld [vmem:[%s5 + $0x70] sm:$0xff]
        %v1291 = vld [vmem:[%s5 + $0x78] sm:$0xff]
        %1293 = vset.pattern.permute.xlu0 0
        %1294 = vperm.xlu0 %1293, %v1276
        %v1295 = vpop.permute.xlu0 %1294
        %1298 = vset.pattern.permute.xlu0 0
        %1299 = vperm.xlu0 %1298, %v1277
        %v1300 = vpop.permute.xlu0 %1299
        %1303 = vset.pattern.permute.xlu0 0
        %1304 = vperm.xlu0 %1303, %v1278
        %v1305 = vpop.permute.xlu0 %1304
        %1308 = vset.pattern.permute.xlu0 0
        %1309 = vperm.xlu0 %1308, %v1279
        %v1310 = vpop.permute.xlu0 %1309
        %1313 = vset.pattern.permute.xlu0 0
        %1314 = vperm.xlu0 %1313, %v1280
        %v1315 = vpop.permute.xlu0 %1314
        %1318 = vset.pattern.permute.xlu0 0
        %1319 = vperm.xlu0 %1318, %v1281
        %v1320 = vpop.permute.xlu0 %1319
        %1323 = vset.pattern.permute.xlu0 0
        %1324 = vperm.xlu0 %1323, %v1282
        %v1325 = vpop.permute.xlu0 %1324
        %1328 = vset.pattern.permute.xlu0 0
        %1329 = vperm.xlu0 %1328, %v1283
        %v1330 = vpop.permute.xlu0 %1329
        %1333 = vset.pattern.permute.xlu0 0
        %1334 = vperm.xlu0 %1333, %v1284
        %v1335 = vpop.permute.xlu0 %1334
        %1338 = vset.pattern.permute.xlu0 0
        %1339 = vperm.xlu0 %1338, %v1285
        %v1340 = vpop.permute.xlu0 %1339
        %1343 = vset.pattern.permute.xlu0 0
        %1344 = vperm.xlu0 %1343, %v1286
        %v1345 = vpop.permute.xlu0 %1344
        %1348 = vset.pattern.permute.xlu0 0
        %1349 = vperm.xlu0 %1348, %v1287
        %v1350 = vpop.permute.xlu0 %1349
        %1353 = vset.pattern.permute.xlu0 0
        %1354 = vperm.xlu0 %1353, %v1288
        %v1355 = vpop.permute.xlu0 %1354
        %1358 = vset.pattern.permute.xlu0 0
        %1359 = vperm.xlu0 %1358, %v1289
        %v1360 = vpop.permute.xlu0 %1359
        %1363 = vset.pattern.permute.xlu0 0
        %1364 = vperm.xlu0 %1363, %v1290
        %v1365 = vpop.permute.xlu0 %1364
        %1368 = vset.pattern.permute.xlu0 0
        %1369 = vperm.xlu0 %1368, %v1291
        %v1370 = vpop.permute.xlu0 %1369
        %v1372 = vmul.f32 %v1295, %v1214
        %v1373 = vmul.f32 %v1300, %v1217
        %v1374 = vmul.f32 %v1305, %v1222
        %v1375 = vmul.f32 %v1310, %v1225
        %v1376 = vmul.f32 %v1315, %v1230
        %v1377 = vmul.f32 %v1320, %v1233
        %v1378 = vmul.f32 %v1325, %v1238
        %v1379 = vmul.f32 %v1330, %v1241
        %v1380 = vmul.f32 %v1335, %v1246
        %v1381 = vmul.f32 %v1340, %v1249
        %v1382 = vmul.f32 %v1345, %v1254
        %v1383 = vmul.f32 %v1350, %v1257
        %v1384 = vmul.f32 %v1355, %v1262
        %v1385 = vmul.f32 %v1360, %v1265
        %v1386 = vmul.f32 %v1365, %v1270
        %v1387 = vmul.f32 %v1370, %v1273
        %v1388 = vpack.c.bf16 %v1373, %v1372
        %v1389 = vpack.c.bf16 %v1375, %v1374
        %v1390 = vpack.c.bf16 %v1377, %v1376
        %v1391 = vpack.c.bf16 %v1379, %v1378
        %v1392 = vpack.c.bf16 %v1381, %v1380
        %v1393 = vpack.c.bf16 %v1383, %v1382
        %v1394 = vpack.c.bf16 %v1385, %v1384
        %v1395 = vpack.c.bf16 %v1387, %v1386
        %1396 = vmatprep.subr.bf16.mxu0 0
        %1397 = vmatpush1.bf16.msra.mxu0 %v1388
        %1398 = vmatprep.subr.bf16.mxu0 0
        %1399 = vmatpush1.bf16.msra.mxu0 %v1389
        %1400 = vmatprep.subr.bf16.mxu0 0
        %1401 = vmatpush1.bf16.msra.mxu0 %v1390
        %1402 = vmatprep.subr.bf16.mxu0 0
        %1403 = vmatpush1.bf16.msra.mxu0 %v1391
        %1404 = vmatprep.subr.bf16.mxu0 0
        %1405 = vmatpush1.bf16.msra.mxu0 %v1392
        %1406 = vmatprep.subr.bf16.mxu0 0
        %1407 = vmatpush1.bf16.msra.mxu0 %v1393
        %1408 = vmatprep.subr.bf16.mxu0 0
        %1409 = vmatpush1.bf16.msra.mxu0 %v1394
        %1410 = vmatprep.subr.bf16.mxu0 0
        %1411 = vmatpush1.bf16.msra.mxu0 %v1395
        %1412 = vmatprep.subr.bf16.mxu0 0
        %1413 = vmatpush1.bf16.msra.mxu0 0
        %1414 = vmatprep.subr.bf16.mxu0 0
        %1415 = vmatpush1.bf16.msra.mxu0 0
        %1416 = vmatprep.subr.bf16.mxu0 0
        %1417 = vmatpush1.bf16.msra.mxu0 0
        %1418 = vmatprep.subr.bf16.mxu0 0
        %1419 = vmatpush1.bf16.msra.mxu0 0
        %1420 = vmatprep.subr.bf16.mxu0 0
        %1421 = vmatpush1.bf16.msra.mxu0 0
        %1422 = vmatprep.subr.bf16.mxu0 0
        %1423 = vmatpush1.bf16.msra.mxu0 0
        %1424 = vmatprep.subr.bf16.mxu0 0
        %1425 = vmatpush1.bf16.msra.mxu0 0
        %1426 = vmatprep.subr.bf16.mxu0 0
        %1427 = vmatpush1.bf16.msra.mxu0 0
        %1428 = vmatprep.mubr.bf16.mxu0 0
        %1429 = vmatmul.mubr.bf16.gmra.mrb[0].mxu0 %v873
        %v1430 = vpop.f32.mrb[0].mxu0
        %v1431 = vadd.f32 0.0, %v1430
        %v1432 = vpop.f32.mrb[0].mxu0
        %v1433 = vpop.f32.mrb[0].mxu0
        %v1434 = vadd.f32 0.0, %v1433
        %v1435 = vpop.f32.mrb[0].mxu0
        %1436 = vmatprep.mubr.bf16.mxu0 0
        %1437 = vmatmul.mubr.bf16.gmra.mrb[0].mxu0 %v874
        %v1438 = vpop.f32.mrb[0].mxu0
        %v1439 = vadd.f32 0.0, %v1438
        %v1440 = vpop.f32.mrb[0].mxu0
        %v1441 = vpop.f32.mrb[0].mxu0
        %v1442 = vadd.f32 0.0, %v1441
        %v1443 = vpop.f32.mrb[0].mxu0
        %1444 = vmatprep.mubr.bf16.mxu0 0
        %1445 = vmatmul.mubr.bf16.gmra.mrb[0].mxu0 %v875
        %v1446 = vpop.f32.mrb[0].mxu0
        %v1447 = vadd.f32 0.0, %v1446
        %v1448 = vpop.f32.mrb[0].mxu0
        %v1449 = vpop.f32.mrb[0].mxu0
        %v1450 = vadd.f32 0.0, %v1449
        %v1451 = vpop.f32.mrb[0].mxu0
        %1452 = vmatprep.mubr.bf16.mxu0 0
        %1453 = vmatmul.mubr.bf16.gmra.mrb[0].mxu0 %v876
        %v1454 = vpop.f32.mrb[0].mxu0
        %v1455 = vadd.f32 0.0, %v1454
        %v1456 = vpop.f32.mrb[0].mxu0
        %v1457 = vpop.f32.mrb[0].mxu0
        %v1458 = vadd.f32 0.0, %v1457
        %v1459 = vpop.f32.mrb[0].mxu0
        %1460 = vmatprep.mubr.bf16.mxu0 0
        %1461 = vmatmul.mubr.bf16.gmra.mrb[0].mxu0 %v877
        %v1462 = vpop.f32.mrb[0].mxu0
        %v1463 = vadd.f32 0.0, %v1462
        %v1464 = vpop.f32.mrb[0].mxu0
        %v1465 = vpop.f32.mrb[0].mxu0
        %v1466 = vadd.f32 0.0, %v1465
        %v1467 = vpop.f32.mrb[0].mxu0
        %1468 = vmatprep.mubr.bf16.mxu0 0
        %1469 = vmatmul.mubr.bf16.gmra.mrb[0].mxu0 %v878
        %v1470 = vpop.f32.mrb[0].mxu0
        %v1471 = vadd.f32 0.0, %v1470
        %v1472 = vpop.f32.mrb[0].mxu0
        %v1473 = vpop.f32.mrb[0].mxu0
        %v1474 = vadd.f32 0.0, %v1473
        %v1475 = vpop.f32.mrb[0].mxu0
        %1476 = vmatprep.mubr.bf16.mxu0 0
        %1477 = vmatmul.mubr.bf16.gmra.mrb[0].mxu0 %v879
        %v1478 = vpop.f32.mrb[0].mxu0
        %v1479 = vadd.f32 0.0, %v1478
        %v1480 = vpop.f32.mrb[0].mxu0
        %v1481 = vpop.f32.mrb[0].mxu0
        %v1482 = vadd.f32 0.0, %v1481
        %v1483 = vpop.f32.mrb[0].mxu0
        %1484 = vmatprep.mubr.bf16.mxu0 0
        %1485 = vmatmul.mubr.bf16.gmra.mrb[0].mxu0 %v880
        %v1486 = vpop.f32.mrb[0].mxu0
        %v1487 = vadd.f32 0.0, %v1486
        %v1488 = vpop.f32.mrb[0].mxu0
        %v1489 = vpop.f32.mrb[0].mxu0
        %v1490 = vadd.f32 0.0, %v1489
        %v1491 = vpop.f32.mrb[0].mxu0
        %1492 = vdwg.mxu0
        %1493 = vst [vmem:[%s301] sm:$0xff] %v1431
        %1494 = vst [vmem:[%s301 + $0x8] sm:$0xff] %v1434
        %1495 = vst [vmem:[%s301 + $0x10] sm:$0xff] %v1439
        %1496 = vst [vmem:[%s301 + $0x18] sm:$0xff] %v1442
        %1497 = vst [vmem:[%s301 + $0x20] sm:$0xff] %v1447
        %1498 = vst [vmem:[%s301 + $0x28] sm:$0xff] %v1450
        %1499 = vst [vmem:[%s301 + $0x30] sm:$0xff] %v1455
        %1500 = vst [vmem:[%s301 + $0x38] sm:$0xff] %v1458
        %1501 = vst [vmem:[%s301 + $0x40] sm:$0xff] %v1463
        %1502 = vst [vmem:[%s301 + $0x48] sm:$0xff] %v1466
        %1503 = vst [vmem:[%s301 + $0x50] sm:$0xff] %v1471
        %1504 = vst [vmem:[%s301 + $0x58] sm:$0xff] %v1474
        %1505 = vst [vmem:[%s301 + $0x60] sm:$0xff] %v1479
        %1506 = vst [vmem:[%s301 + $0x68] sm:$0xff] %v1482
        %1507 = vst [vmem:[%s301 + $0x70] sm:$0xff] %v1487
        %1508 = vst [vmem:[%s301 + $0x78] sm:$0xff] %v1490
        %s1509 = sand.u32 %s191, 1
        %s1510 = scalar_lea.sflag [#allocation3], %s1509
        %s1511 = sand.u32 %s191, 1
        %s1512 = smul.addr %s1511, 128
        %s1513 = scalar_lea.vmem [#allocation2], %s1512
        // Predicated region
        $region49: #{tpu_custom_call.1} parent=47 // pred_check
          %p1514 = pneg %p201
        $region50: #{tpu_custom_call.1} parent=47 // pred_check_branch
          %1516 = sbr.rel (%p1514) target = $region52
        $region51: #{tpu_custom_call.1} parent=47 // pred_region
          %s1518 = ssub.s32 2048, 2048
          %1519 = vsyncadd %s1510, %s1518
          %s1520 = smul.addr %s21, 16
          %s1521 = smul.addr %s1520, 128
          %s1522 = scalar_lea.hbm %s7, %s1521
          %s1523 = sshll.u32 %s1513, 4
          %s1524 = int_to_ptr.vmem [resolvable:$true] %s1523
          %1529 = dma.vmem_to_hbm [thread:$0]  %s1524, 2048, %s1522, %s1510, 128, 128, 8
        $region52: #{tpu_custom_call.1} parent=47 // pred_fallthru
          _
      $region48: #{tpu_custom_call.1} parent=5 // pred_fallthru
        _
      %p1530 = scmp.le.s32.totalorder 2, %s16
      // Predicated region
      $region53: #{tpu_custom_call.1} parent=5 // pred_check
        %p1531 = pneg %p1530
      $region54: #{tpu_custom_call.1} parent=5 // pred_check_branch
        %1533 = sbr.rel (%p1531) target = $region56
      $region55: #{tpu_custom_call.1} parent=5 // pred_region
        %s1534 = ssub.s32 %s16, 2
        // Predicated region
        $region57: #{tpu_custom_call.1} parent=55 // pred_check
          %p1535 = pneg %p207
        $region58: #{tpu_custom_call.1} parent=55 // pred_check_branch
          %1537 = sbr.rel (%p1535) target = $region60
        $region59: #{tpu_custom_call.1} parent=55 // pred_region
          %s1538 = sand.u32 %s192, 1
          %s1539 = scalar_lea.sflag [#allocation3], %s1538
          %s1540 = sand.u32 %s192, 1
          %s1541 = smul.addr %s1540, 128
          %s1542 = scalar_lea.vmem [#allocation2], %s1541
          %1543 = dma.done %s1539, 2048
        $region60: #{tpu_custom_call.1} parent=55 // pred_fallthru
          _
      $region56: #{tpu_custom_call.1} parent=5 // pred_fallthru
        _
    $region6: #{tpu_custom_call.1} parent=1 // loop_footer
      %s20 = sadd.s32 1, %s16
    $region7: #{tpu_custom_call.1} parent=1 // loop_footer_branch
      %15 = sbr.rel target = $region3
    $region8: #{tpu_custom_call.1} parent=1 // loop_exit
      _
    %1544 = vsyncpa [#allocation3], 1
    %s1545 = scalar_lea.sflag [#allocation3], 1
    %1546 = vsyncpa %s1545, 1

</llo_original>
